<compile_context>
chip_gen: v7x
topology: tpu7x:2x2x1
jax: 0.10.0
libtpu: 0.0.40
codegen_flags: <defaults>
</compile_context>

<pallas_src>
import jax
import jax.numpy as jnp
from jax import lax
from jax.experimental import pallas as pl
from jax.experimental.pallas import tpu as pltpu


# ----------------------------------------------------------------------------
# Fused forward kernel
# ----------------------------------------------------------------------------
def _vae_fused_kernel(
    x_ref,            # (T*B, I)   f32   flattened input sequence
    h0_ref, c0_ref,   # (B, H)     f32   initial states
    wi_enc_ref,       # (I, 4H)    bf16  encoder input weights   [i,f,o,g]
    wh_enc_ref,       # (H, 4H)    bf16  encoder recurrent weights
    b_enc_ref,        # (1, 4H)    f32   encoder bias (ih+hh)
    w2122_ref,        # (H, 2Z)    bf16  fc21|fc22 fused
    b2122_ref,        # (1, 2Z)    f32
    eps_ref,          # (T*B, Z)   f32
    w3i_ref,          # (Z, 4H)    bf16  fc3 folded into decoder Wi
    b3i_ref,          # (1, 4H)    f32   b3 @ Wi_dec + b_dec
    wh_dec_ref,       # (H, 4H)    bf16  decoder recurrent weights
    w4_ref,           # (H, I)     bf16
    b4_ref,           # (1, I)     f32
    y_out_ref,        # (T*B, I)   f32   sigmoid(fc4(y_dec))
    ml_ref,           # (T*B, 2Z)  f32   mean | logvar slab
    hN_ref, cN_ref,   # (B, H)     f32   final decoder states
    gx_scr,           # (T*B, 4H)  f32   hoisted input-projection gates
    y_scr,            # (T*B, H)   f32   per-step hidden outputs (enc then dec)
):
    f32 = jnp.float32
    bf16 = jnp.bfloat16
    B, H = h0_ref.shape
    TB = x_ref.shape[0]
    T = TB // B
    Z = eps_ref.shape[1]

    def run_lstm(wh_bf, h0, c0):
        """Recurrence over T steps; reads hoisted input gates from gx_scr,
        writes per-step hidden states into y_scr, returns (hT, cT).
        Gate layout is (i, f, o | g): sigmoid gates lane-contiguous, tanh last.
        """
        def body(t, carry):
            h, c = carry
            row = pl.multiple_of(t * B, B)
            # bf16 MXU operands, f32 accumulate; element-wise stays f32.
            gates = gx_scr[pl.ds(row, B), :] + jnp.dot(
                h.astype(bf16), wh_bf, preferred_element_type=f32)   # (B, 4H)
            sig = jax.nn.sigmoid(gates)                 # one EUP pass (B,4H)
            i_g = sig[:, 0 * H:1 * H]
            f_g = sig[:, 1 * H:2 * H]
            o_g = sig[:, 2 * H:3 * H]
            g_g = jnp.tanh(gates[:, 3 * H:4 * H])       # tanh only on g column
            c_new = f_g * c + i_g * g_g
            h_new = o_g * jnp.tanh(c_new)
            y_scr[pl.ds(row, B), :] = h_new
            return h_new, c_new

        return lax.fori_loop(0, T, body, (h0, c0), unroll=True)

    # ---- encoder: hoisted input projection, then recurrence -----------------
    gx_scr[...] = jnp.dot(x_ref[...].astype(bf16), wi_enc_ref[...],
                          preferred_element_type=f32) + b_enc_ref[...]
    h_enc, c_enc = run_lstm(wh_enc_ref[...], h0_ref[...], c0_ref[...])

    # ---- latent heads: fc21 | fc22 as one matmul -----------------------------
    y_enc = y_scr[...]                                        # (T*B, H)
    ml = jnp.dot(y_enc.astype(bf16), w2122_ref[...],
                 preferred_element_type=f32) + b2122_ref[...]
    ml_ref[...] = ml

    mu = ml[:, 0:Z]
    logvar = ml[:, Z:2 * Z]
    z = mu + eps_ref[...] * jnp.exp(0.5 * logvar)             # reparametrize

    # ---- fc3 folded into decoder input projection (single (TB,Z)@(Z,4H)) ----
    gx_scr[...] = jnp.dot(z.astype(bf16), w3i_ref[...],
                          preferred_element_type=f32) + b3i_ref[...]

    # ---- decoder recurrence (re-uses y_scr for its hidden outputs) ----------
    h_dec, c_dec = run_lstm(wh_dec_ref[...], h_enc, c_enc)

    # ---- fc4 + sigmoid -------------------------------------------------------
    y_dec = y_scr[...]                                        # (T*B, H)
    y_out_ref[...] = jax.nn.sigmoid(
        jnp.dot(y_dec.astype(bf16), w4_ref[...],
                preferred_element_type=f32) + b4_ref[...])

    # final states written exactly once
    hN_ref[...] = h_dec
    cN_ref[...] = c_dec


def _fused_forward_call(x_flat, h0, c0, wi_enc, wh_enc, b_enc, w2122, b2122,
                        eps, w3i, b3i, wh_dec, w4, b4):
    TB, I = x_flat.shape
    B, H = h0.shape
    Z = eps.shape[1]

    # Explicit VMEM budget: inputs + outputs + scratch, 2x headroom, clamped
    # below v7x's 64 MiB physical VMEM.
    need_bytes = (
        4 * (TB * I + 2 * B * H + TB * Z                       # f32 inputs
             + 4 * H + 2 * Z + 4 * H + I                       # f32 biases
             + TB * I + TB * 2 * Z + 2 * B * H                 # f32 outputs
             + TB * 4 * H + TB * H)                            # f32 scratch
        + 2 * (I * 4 * H + 2 * (H * 4 * H) + H * 2 * Z         # bf16 weights
               + Z * 4 * H + H * I))
    vmem_limit = min(max(2 * need_bytes, 16 * 1024 * 1024), 48 * 1024 * 1024)

    return pl.pallas_call(
        _vae_fused_kernel,
        out_shape=(
            jax.ShapeDtypeStruct((TB, I), jnp.float32),       # y_out
            jax.ShapeDtypeStruct((TB, 2 * Z), jnp.float32),   # mean | logvar
            jax.ShapeDtypeStruct((B, H), jnp.float32),        # h_n
            jax.ShapeDtypeStruct((B, H), jnp.float32),        # c_n
        ),
        scratch_shapes=[
            pltpu.VMEM((TB, 4 * H), jnp.float32),   # hoisted gate slab
            pltpu.VMEM((TB, H), jnp.float32),       # hidden outputs (enc/dec)
        ],
        compiler_params=pltpu.CompilerParams(vmem_limit_bytes=vmem_limit),
    )(x_flat, h0, c0, wi_enc, wh_enc, b_enc, w2122, b2122,
      eps, w3i, b3i, wh_dec, w4, b4)


# ----------------------------------------------------------------------------
# Parameter construction (deterministic, PyTorch-shaped, stored pre-transposed,
# PyTorch gate order i,f,g,o)
# ----------------------------------------------------------------------------
def init_params(key, input_size, h_size, z_size):
    def uni(k, shape, bound):
        return jax.random.uniform(k, shape, jnp.float32, -bound, bound)

    ks = jax.random.split(key, 16)
    sH = 1.0 / jnp.sqrt(h_size)
    sZ = 1.0 / jnp.sqrt(z_size)
    return {
        # encoder LSTM (W stored transposed for x @ W); gate order i,f,g,o
        "wi_enc": uni(ks[0], (input_size, 4 * h_size), sH),
        "wh_enc": uni(ks[1], (h_size, 4 * h_size), sH),
        "b_enc": uni(ks[2], (1, 4 * h_size), sH) + uni(ks[3], (1, 4 * h_size), sH),
        # fc21 / fc22
        "w21": uni(ks[4], (h_size, z_size), sH),
        "b21": uni(ks[5], (1, z_size), sH),
        "w22": uni(ks[6], (h_size, z_size), sH),
        "b22": uni(ks[7], (1, z_size), sH),
        # fc3
        "w3": uni(ks[8], (z_size, h_size), sZ),
        "b3": uni(ks[9], (1, h_size), sZ),
        # decoder LSTM (input size = h_size)
        "wi_dec": uni(ks[10], (h_size, 4 * h_size), sH),
        "wh_dec": uni(ks[11], (h_size, 4 * h_size), sH),
        "b_dec": uni(ks[12], (1, 4 * h_size), sH) + uni(ks[13], (1, 4 * h_size), sH),
        # fc4
        "w4": uni(ks[14], (h_size, input_size), sH),
        "b4": uni(ks[15], (1, input_size), sH),
    }


def _reorder_gates(w, H):
    """Gate columns (i,f,g,o) -> (i,f,o,g) so the three sigmoid gates are
    lane-contiguous and tanh applies only to the trailing H lanes."""
    return jnp.concatenate(
        [w[..., 0:2 * H], w[..., 3 * H:4 * H], w[..., 2 * H:3 * H]], axis=-1)


# ----------------------------------------------------------------------------
# Full forward: mirrors RNN_Autoencoder.forward(x, h)
# ----------------------------------------------------------------------------
@jax.jit
def rnn_autoencoder_forward(params, x, h0, c0, eps):
    T, B, I = x.shape
    H = params["wh_enc"].shape[0]
    Z = params["w21"].shape[1]
    hp = lax.Precision.HIGHEST
    bf16 = jnp.bfloat16

    # gate reorder (i,f,g,o) -> (i,f,o,g)
    wi_enc = _reorder_gates(params["wi_enc"], H)
    wh_enc = _reorder_gates(params["wh_enc"], H)
    b_enc = _reorder_gates(params["b_enc"], H)
    wi_dec = _reorder_gates(params["wi_dec"], H)
    wh_dec = _reorder_gates(params["wh_dec"], H)
    b_dec = _reorder_gates(params["b_dec"], H)

    # fuse fc21 | fc22 into one lane-denser matmul slab
    w2122 = jnp.concatenate([params["w21"], params["w22"]], axis=1)
    b2122 = jnp.concatenate([params["b21"], params["b22"]], axis=1)

    # fold fc3 into the decoder input projection (linear o linear, exact algebra)
    w3i = jnp.dot(params["w3"], wi_dec, precision=hp)                 # (Z, 4H)
    b3i = jnp.dot(params["b3"], wi_dec, precision=hp) + b_dec         # (1, 4H)

    x_flat = x.reshape(T * B, I)

    # Weight slabs pre-cast to bf16 (MXU-native on v5e/v6e/v7x); activations
    # are cast to bf16 in-kernel right before each dot, accumulation is f32.
    y_out, ml, h_n, c_n = _fused_forward_call(
        x_flat, h0[0], c0[0],
        wi_enc.astype(bf16), wh_enc.astype(bf16), b_enc,
        w2122.astype(bf16), b2122, eps,
        w3i.astype(bf16), b3i,
        wh_dec.astype(bf16),
        params["w4"].astype(bf16), params["b4"])

    mean = ml[:, :Z]
    logvar = ml[:, Z:]
    return y_out, mean, logvar, (h_n[None, ...], c_n[None, ...])


# ----------------------------------------------------------------------------
# Pure-JAX f32 reference (PyTorch semantics, gate order i,f,g,o)
# ----------------------------------------------------------------------------
def _reference_forward(params, x, h0, c0, eps):
    hp = lax.Precision.HIGHEST
    T, B, I = x.shape
    H = params["wh_enc"].shape[0]

    def lstm(xseq, h, c, wi, wh, b):
        outs = []
        for t in range(xseq.shape[0]):
            g = (jnp.dot(xseq[t], wi, precision=hp)
                 + jnp.dot(h, wh, precision=hp) + b)
            i_g = jax.nn.sigmoid(g[:, 0 * H:1 * H])
            f_g = jax.nn.sigmoid(g[:, 1 * H:2 * H])
            g_g = jnp.tanh(g[:, 2 * H:3 * H])
            o_g = jax.nn.sigmoid(g[:, 3 * H:4 * H])
            c = f_g * c + i_g * g_g
            h = o_g * jnp.tanh(c)
            outs.append(h)
        return jnp.stack(outs), h, c

    y_enc, h_e, c_e = lstm(x, h0[0], c0[0],
                           params["wi_enc"], params["wh_enc"], params["b_enc"])
    yf = y_enc.reshape(-1, H)
    mean = jnp.dot(yf, params["w21"], precision=hp) + params["b21"]
    logvar = jnp.dot(yf, params["w22"], precision=hp) + params["b22"]
    z = mean + eps * jnp.exp(0.5 * logvar)
    y3 = (jnp.dot(z, params["w3"], precision=hp) + params["b3"]).reshape(T, B, H)
    y_dec, h_d, c_d = lstm(y3, h_e, c_e,
                           params["wi_dec"], params["wh_dec"], params["b_dec"])
    y_out = jax.nn.sigmoid(
        jnp.dot(y_dec.reshape(-1, H), params["w4"], precision=hp) + params["b4"])
    return y_out, mean, logvar, h_d, c_d


if __name__ == "__main__":
    # Small shapes consistent with the module (seq-major LSTM input)
    T, B = 8, 8
    INPUT_SIZE = 16
    H_SIZE = 32
    Z_SIZE = 16
    N_LAYERS = 1

    key = jax.random.PRNGKey(0)
    k_x, k_p, k_eps = jax.random.split(key, 3)

    params = init_params(k_p, INPUT_SIZE, H_SIZE, Z_SIZE)

    x = jax.random.normal(k_x, (T, B, INPUT_SIZE), jnp.float32)
    # get_initial_states(batch_size) -> zeros (num_layers, B, H)
    h0 = jnp.zeros((N_LAYERS, B, H_SIZE), jnp.float32)
    c0 = jnp.zeros((N_LAYERS, B, H_SIZE), jnp.float32)
    # deterministic stand-in for torch.cuda.FloatTensor(std.size()).normal_()
    eps = jax.random.normal(k_eps, (T * B, Z_SIZE), jnp.float32)

    y_out, mean, logvar, (h_n, c_n) = rnn_autoencoder_forward(params, x, h0, c0, eps)
    jax.block_until_ready((y_out, mean, logvar, h_n, c_n))

    assert y_out.shape == (T * B, INPUT_SIZE)
    assert mean.shape == (T * B, Z_SIZE)
    assert logvar.shape == (T * B, Z_SIZE)
    assert h_n.shape == (N_LAYERS, B, H_SIZE)
    assert c_n.shape == (N_LAYERS, B, H_SIZE)

    # Correctness check against the pure-f32 reference.  Tolerance widened
    # slightly vs. the previous all-f32 kernel because the MXU now sees bf16
    # operands (per the performance review); element-wise math is still f32.
    r_y, r_mean, r_logvar, r_h, r_c = _reference_forward(params, x, h0, c0, eps)
    tol = dict(atol=2e-2, rtol=2e-2)
    assert jnp.allclose(y_out, r_y, **tol)
    assert jnp.allclose(mean, r_mean, **tol)
    assert jnp.allclose(logvar, r_logvar, **tol)
    assert jnp.allclose(h_n[0], r_h, **tol)
    assert jnp.allclose(c_n[0], r_c, **tol)

    print("KERNEL_OK")
</pallas_src>

<mosaic_0001>
module attributes {stable_mosaic.version = 11 : i64} {
  func.func @_vae_fused_kernel(%arg0: memref<64x16xf32, #tpu.memory_space<vmem>>, %arg1: memref<8x32xf32, #tpu.memory_space<vmem>>, %arg2: memref<8x32xf32, #tpu.memory_space<vmem>>, %arg3: memref<16x128xbf16, #tpu.memory_space<vmem>>, %arg4: memref<32x128xbf16, #tpu.memory_space<vmem>>, %arg5: memref<1x128xf32, #tpu.memory_space<vmem>>, %arg6: memref<32x32xbf16, #tpu.memory_space<vmem>>, %arg7: memref<1x32xf32, #tpu.memory_space<vmem>>, %arg8: memref<64x16xf32, #tpu.memory_space<vmem>>, %arg9: memref<16x128xbf16, #tpu.memory_space<vmem>>, %arg10: memref<1x128xf32, #tpu.memory_space<vmem>>, %arg11: memref<32x128xbf16, #tpu.memory_space<vmem>>, %arg12: memref<32x16xbf16, #tpu.memory_space<vmem>>, %arg13: memref<1x16xf32, #tpu.memory_space<vmem>>, %arg14: memref<64x16xf32, #tpu.memory_space<vmem>>, %arg15: memref<64x32xf32, #tpu.memory_space<vmem>>, %arg16: memref<8x32xf32, #tpu.memory_space<vmem>>, %arg17: memref<8x32xf32, #tpu.memory_space<vmem>>, %arg18: memref<64x128xf32, #tpu.memory_space<vmem>>, %arg19: memref<64x32xf32, #tpu.memory_space<vmem>>) attributes {dimension_semantics = [], scalar_prefetch = 0 : i64, scratch_operands = 2 : i64, tpu.core_type = #tpu.core_type<tc>} {
    %c0 = arith.constant 0 : index
    %c0_0 = arith.constant 0 : index
    %0 = vector.load %arg0[%c0, %c0_0] : memref<64x16xf32, #tpu.memory_space<vmem>>, vector<64x16xf32>
    %1 = arith.truncf %0 : vector<64x16xf32> to vector<64x16xbf16>
    %c0_1 = arith.constant 0 : index
    %c0_2 = arith.constant 0 : index
    %2 = vector.load %arg3[%c0_1, %c0_2] : memref<16x128xbf16, #tpu.memory_space<vmem>>, vector<16x128xbf16>
    %cst = arith.constant dense<0.000000e+00> : vector<64x128xf32>
    %3 = tpu.matmul %1, %2, %cst {dimension_numbers = #tpu.dot_dimension_numbers<[1], [0], [0], [1], [0, 0, 1, 1], [], []>} : vector<64x16xbf16>, vector<16x128xbf16>, vector<64x128xf32> -> vector<64x128xf32>
    %c0_3 = arith.constant 0 : index
    %c0_4 = arith.constant 0 : index
    %4 = vector.load %arg5[%c0_3, %c0_4] : memref<1x128xf32, #tpu.memory_space<vmem>>, vector<1x128xf32>
    %5 = vector.broadcast %4 : vector<1x128xf32> to vector<64x128xf32>
    %6 = arith.addf %3, %5 : vector<64x128xf32>
    %c0_5 = arith.constant 0 : index
    %c0_6 = arith.constant 0 : index
    %7 = vector.load %arg18[%c0_5, %c0_6] : memref<64x128xf32, #tpu.memory_space<vmem>>, vector<64x128xf32>
    tpu.vector_store %arg18[%c0_5, %c0_6], %6 {strides = array<i32>} : memref<64x128xf32, #tpu.memory_space<vmem>>, vector<64x128xf32>,
    %c0_7 = arith.constant 0 : index
    %c0_8 = arith.constant 0 : index
    %8 = vector.load %arg4[%c0_7, %c0_8] : memref<32x128xbf16, #tpu.memory_space<vmem>>, vector<32x128xbf16>
    %c0_9 = arith.constant 0 : index
    %c0_10 = arith.constant 0 : index
    %9 = vector.load %arg1[%c0_9, %c0_10] : memref<8x32xf32, #tpu.memory_space<vmem>>, vector<8x32xf32>
    %c0_11 = arith.constant 0 : index
    %c0_12 = arith.constant 0 : index
    %10 = vector.load %arg2[%c0_11, %c0_12] : memref<8x32xf32, #tpu.memory_space<vmem>>, vector<8x32xf32>
    %c0_i32 = arith.constant 0 : i32
    %c8_i32 = arith.constant 8 : i32
    %11 = arith.muli %c0_i32, %c8_i32 : i32
    %12 = tpu.assume_multiple %11, 8 : i32
    %13 = arith.index_cast %12 : i32 to index
    %c0_13 = arith.constant 0 : index
    %14 = vector.load %arg18[%13, %c0_13] : memref<64x128xf32, #tpu.memory_space<vmem>>, vector<8x128xf32>
    %15 = arith.truncf %9 : vector<8x32xf32> to vector<8x32xbf16>
    %cst_14 = arith.constant dense<0.000000e+00> : vector<8x128xf32>
    %16 = tpu.matmul %15, %8, %cst_14 {dimension_numbers = #tpu.dot_dimension_numbers<[1], [0], [0], [1], [0, 0, 1, 1], [], []>} : vector<8x32xbf16>, vector<32x128xbf16>, vector<8x128xf32> -> vector<8x128xf32>
    %17 = arith.addf %14, %16 : vector<8x128xf32>
    %18 = arith.negf %17 : vector<8x128xf32>
    %19 = math.exp %18 : vector<8x128xf32>
    %cst_15 = arith.constant 1.000000e+00 : f32
    %20 = vector.broadcast %cst_15 : f32 to vector<8x128xf32>
    %21 = arith.addf %20, %19 : vector<8x128xf32>
    %22 = arith.divf %20, %21 : vector<8x128xf32>
    %23 = vector.extract_strided_slice %22 {offsets = [0, 0], sizes = [8, 32], strides = [1, 1]} : vector<8x128xf32> to vector<8x32xf32>
    %24 = vector.extract_strided_slice %22 {offsets = [0, 32], sizes = [8, 32], strides = [1, 1]} : vector<8x128xf32> to vector<8x32xf32>
    %25 = vector.extract_strided_slice %22 {offsets = [0, 64], sizes = [8, 32], strides = [1, 1]} : vector<8x128xf32> to vector<8x32xf32>
    %26 = vector.extract_strided_slice %17 {offsets = [0, 96], sizes = [8, 32], strides = [1, 1]} : vector<8x128xf32> to vector<8x32xf32>
    %27 = math.tanh %26 : vector<8x32xf32>
    %28 = arith.mulf %24, %10 : vector<8x32xf32>
    %29 = arith.mulf %23, %27 : vector<8x32xf32>
    %30 = arith.addf %28, %29 : vector<8x32xf32>
    %31 = math.tanh %30 : vector<8x32xf32>
    %32 = arith.mulf %25, %31 : vector<8x32xf32>
    %33 = arith.index_cast %12 : i32 to index
    %c0_16 = arith.constant 0 : index
    %34 = vector.load %arg19[%33, %c0_16] : memref<64x32xf32, #tpu.memory_space<vmem>>, vector<8x32xf32>
    tpu.vector_store %arg19[%33, %c0_16], %32 {strides = array<i32>} : memref<64x32xf32, #tpu.memory_space<vmem>>, vector<8x32xf32>,
    %c1_i32 = arith.constant 1 : i32
    %c8_i32_17 = arith.constant 8 : i32
    %35 = arith.muli %c1_i32, %c8_i32_17 : i32
    %36 = tpu.assume_multiple %35, 8 : i32
    %37 = arith.index_cast %36 : i32 to index
    %c0_18 = arith.constant 0 : index
    %38 = vector.load %arg18[%37, %c0_18] : memref<64x128xf32, #tpu.memory_space<vmem>>, vector<8x128xf32>
    %39 = arith.truncf %32 : vector<8x32xf32> to vector<8x32xbf16>
    %cst_19 = arith.constant dense<0.000000e+00> : vector<8x128xf32>
    %40 = tpu.matmul %39, %8, %cst_19 {dimension_numbers = #tpu.dot_dimension_numbers<[1], [0], [0], [1], [0, 0, 1, 1], [], []>} : vector<8x32xbf16>, vector<32x128xbf16>, vector<8x128xf32> -> vector<8x128xf32>
    %41 = arith.addf %38, %40 : vector<8x128xf32>
    %42 = arith.negf %41 : vector<8x128xf32>
    %43 = math.exp %42 : vector<8x128xf32>
    %cst_20 = arith.constant 1.000000e+00 : f32
    %44 = vector.broadcast %cst_20 : f32 to vector<8x128xf32>
    %45 = arith.addf %44, %43 : vector<8x128xf32>
    %46 = arith.divf %44, %45 : vector<8x128xf32>
    %47 = vector.extract_strided_slice %46 {offsets = [0, 0], sizes = [8, 32], strides = [1, 1]} : vector<8x128xf32> to vector<8x32xf32>
    %48 = vector.extract_strided_slice %46 {offsets = [0, 32], sizes = [8, 32], strides = [1, 1]} : vector<8x128xf32> to vector<8x32xf32>
    %49 = vector.extract_strided_slice %46 {offsets = [0, 64], sizes = [8, 32], strides = [1, 1]} : vector<8x128xf32> to vector<8x32xf32>
    %50 = vector.extract_strided_slice %41 {offsets = [0, 96], sizes = [8, 32], strides = [1, 1]} : vector<8x128xf32> to vector<8x32xf32>
    %51 = math.tanh %50 : vector<8x32xf32>
    %52 = arith.mulf %48, %30 : vector<8x32xf32>
    %53 = arith.mulf %47, %51 : vector<8x32xf32>
    %54 = arith.addf %52, %53 : vector<8x32xf32>
    %55 = math.tanh %54 : vector<8x32xf32>
    %56 = arith.mulf %49, %55 : vector<8x32xf32>
    %57 = arith.index_cast %36 : i32 to index
    %c0_21 = arith.constant 0 : index
    %58 = vector.load %arg19[%57, %c0_21] : memref<64x32xf32, #tpu.memory_space<vmem>>, vector<8x32xf32>
    tpu.vector_store %arg19[%57, %c0_21], %56 {strides = array<i32>} : memref<64x32xf32, #tpu.memory_space<vmem>>, vector<8x32xf32>,
    %c2_i32 = arith.constant 2 : i32
    %c8_i32_22 = arith.constant 8 : i32
    %59 = arith.muli %c2_i32, %c8_i32_22 : i32
    %60 = tpu.assume_multiple %59, 8 : i32
    %61 = arith.index_cast %60 : i32 to index
    %c0_23 = arith.constant 0 : index
    %62 = vector.load %arg18[%61, %c0_23] : memref<64x128xf32, #tpu.memory_space<vmem>>, vector<8x128xf32>
    %63 = arith.truncf %56 : vector<8x32xf32> to vector<8x32xbf16>
    %cst_24 = arith.constant dense<0.000000e+00> : vector<8x128xf32>
    %64 = tpu.matmul %63, %8, %cst_24 {dimension_numbers = #tpu.dot_dimension_numbers<[1], [0], [0], [1], [0, 0, 1, 1], [], []>} : vector<8x32xbf16>, vector<32x128xbf16>, vector<8x128xf32> -> vector<8x128xf32>
    %65 = arith.addf %62, %64 : vector<8x128xf32>
    %66 = arith.negf %65 : vector<8x128xf32>
    %67 = math.exp %66 : vector<8x128xf32>
    %cst_25 = arith.constant 1.000000e+00 : f32
    %68 = vector.broadcast %cst_25 : f32 to vector<8x128xf32>
    %69 = arith.addf %68, %67 : vector<8x128xf32>
    %70 = arith.divf %68, %69 : vector<8x128xf32>
    %71 = vector.extract_strided_slice %70 {offsets = [0, 0], sizes = [8, 32], strides = [1, 1]} : vector<8x128xf32> to vector<8x32xf32>
    %72 = vector.extract_strided_slice %70 {offsets = [0, 32], sizes = [8, 32], strides = [1, 1]} : vector<8x128xf32> to vector<8x32xf32>
    %73 = vector.extract_strided_slice %70 {offsets = [0, 64], sizes = [8, 32], strides = [1, 1]} : vector<8x128xf32> to vector<8x32xf32>
    %74 = vector.extract_strided_slice %65 {offsets = [0, 96], sizes = [8, 32], strides = [1, 1]} : vector<8x128xf32> to vector<8x32xf32>
    %75 = math.tanh %74 : vector<8x32xf32>
    %76 = arith.mulf %72, %54 : vector<8x32xf32>
    %77 = arith.mulf %71, %75 : vector<8x32xf32>
    %78 = arith.addf %76, %77 : vector<8x32xf32>
    %79 = math.tanh %78 : vector<8x32xf32>
    %80 = arith.mulf %73, %79 : vector<8x32xf32>
    %81 = arith.index_cast %60 : i32 to index
    %c0_26 = arith.constant 0 : index
    %82 = vector.load %arg19[%81, %c0_26] : memref<64x32xf32, #tpu.memory_space<vmem>>, vector<8x32xf32>
    tpu.vector_store %arg19[%81, %c0_26], %80 {strides = array<i32>} : memref<64x32xf32, #tpu.memory_space<vmem>>, vector<8x32xf32>,
    %c3_i32 = arith.constant 3 : i32
    %c8_i32_27 = arith.constant 8 : i32
    %83 = arith.muli %c3_i32, %c8_i32_27 : i32
    %84 = tpu.assume_multiple %83, 8 : i32
    %85 = arith.index_cast %84 : i32 to index
    %c0_28 = arith.constant 0 : index
    %86 = vector.load %arg18[%85, %c0_28] : memref<64x128xf32, #tpu.memory_space<vmem>>, vector<8x128xf32>
    %87 = arith.truncf %80 : vector<8x32xf32> to vector<8x32xbf16>
    %cst_29 = arith.constant dense<0.000000e+00> : vector<8x128xf32>
    %88 = tpu.matmul %87, %8, %cst_29 {dimension_numbers = #tpu.dot_dimension_numbers<[1], [0], [0], [1], [0, 0, 1, 1], [], []>} : vector<8x32xbf16>, vector<32x128xbf16>, vector<8x128xf32> -> vector<8x128xf32>
    %89 = arith.addf %86, %88 : vector<8x128xf32>
    %90 = arith.negf %89 : vector<8x128xf32>
    %91 = math.exp %90 : vector<8x128xf32>
    %cst_30 = arith.constant 1.000000e+00 : f32
    %92 = vector.broadcast %cst_30 : f32 to vector<8x128xf32>
    %93 = arith.addf %92, %91 : vector<8x128xf32>
    %94 = arith.divf %92, %93 : vector<8x128xf32>
    %95 = vector.extract_strided_slice %94 {offsets = [0, 0], sizes = [8, 32], strides = [1, 1]} : vector<8x128xf32> to vector<8x32xf32>
    %96 = vector.extract_strided_slice %94 {offsets = [0, 32], sizes = [8, 32], strides = [1, 1]} : vector<8x128xf32> to vector<8x32xf32>
    %97 = vector.extract_strided_slice %94 {offsets = [0, 64], sizes = [8, 32], strides = [1, 1]} : vector<8x128xf32> to vector<8x32xf32>
    %98 = vector.extract_strided_slice %89 {offsets = [0, 96], sizes = [8, 32], strides = [1, 1]} : vector<8x128xf32> to vector<8x32xf32>
    %99 = math.tanh %98 : vector<8x32xf32>
    %100 = arith.mulf %96, %78 : vector<8x32xf32>
    %101 = arith.mulf %95, %99 : vector<8x32xf32>
    %102 = arith.addf %100, %101 : vector<8x32xf32>
    %103 = math.tanh %102 : vector<8x32xf32>
    %104 = arith.mulf %97, %103 : vector<8x32xf32>
    %105 = arith.index_cast %84 : i32 to index
    %c0_31 = arith.constant 0 : index
    %106 = vector.load %arg19[%105, %c0_31] : memref<64x32xf32, #tpu.memory_space<vmem>>, vector<8x32xf32>
    tpu.vector_store %arg19[%105, %c0_31], %104 {strides = array<i32>} : memref<64x32xf32, #tpu.memory_space<vmem>>, vector<8x32xf32>,
    %c4_i32 = arith.constant 4 : i32
    %c8_i32_32 = arith.constant 8 : i32
    %107 = arith.muli %c4_i32, %c8_i32_32 : i32
    %108 = tpu.assume_multiple %107, 8 : i32
    %109 = arith.index_cast %108 : i32 to index
    %c0_33 = arith.constant 0 : index
    %110 = vector.load %arg18[%109, %c0_33] : memref<64x128xf32, #tpu.memory_space<vmem>>, vector<8x128xf32>
    %111 = arith.truncf %104 : vector<8x32xf32> to vector<8x32xbf16>
    %cst_34 = arith.constant dense<0.000000e+00> : vector<8x128xf32>
    %112 = tpu.matmul %111, %8, %cst_34 {dimension_numbers = #tpu.dot_dimension_numbers<[1], [0], [0], [1], [0, 0, 1, 1], [], []>} : vector<8x32xbf16>, vector<32x128xbf16>, vector<8x128xf32> -> vector<8x128xf32>
    %113 = arith.addf %110, %112 : vector<8x128xf32>
    %114 = arith.negf %113 : vector<8x128xf32>
    %115 = math.exp %114 : vector<8x128xf32>
    %cst_35 = arith.constant 1.000000e+00 : f32
    %116 = vector.broadcast %cst_35 : f32 to vector<8x128xf32>
    %117 = arith.addf %116, %115 : vector<8x128xf32>
    %118 = arith.divf %116, %117 : vector<8x128xf32>
    %119 = vector.extract_strided_slice %118 {offsets = [0, 0], sizes = [8, 32], strides = [1, 1]} : vector<8x128xf32> to vector<8x32xf32>
    %120 = vector.extract_strided_slice %118 {offsets = [0, 32], sizes = [8, 32], strides = [1, 1]} : vector<8x128xf32> to vector<8x32xf32>
    %121 = vector.extract_strided_slice %118 {offsets = [0, 64], sizes = [8, 32], strides = [1, 1]} : vector<8x128xf32> to vector<8x32xf32>
    %122 = vector.extract_strided_slice %113 {offsets = [0, 96], sizes = [8, 32], strides = [1, 1]} : vector<8x128xf32> to vector<8x32xf32>
    %123 = math.tanh %122 : vector<8x32xf32>
    %124 = arith.mulf %120, %102 : vector<8x32xf32>
    %125 = arith.mulf %119, %123 : vector<8x32xf32>
    %126 = arith.addf %124, %125 : vector<8x32xf32>
    %127 = math.tanh %126 : vector<8x32xf32>
    %128 = arith.mulf %121, %127 : vector<8x32xf32>
    %129 = arith.index_cast %108 : i32 to index
    %c0_36 = arith.constant 0 : index
    %130 = vector.load %arg19[%129, %c0_36] : memref<64x32xf32, #tpu.memory_space<vmem>>, vector<8x32xf32>
    tpu.vector_store %arg19[%129, %c0_36], %128 {strides = array<i32>} : memref<64x32xf32, #tpu.memory_space<vmem>>, vector<8x32xf32>,
    %c5_i32 = arith.constant 5 : i32
    %c8_i32_37 = arith.constant 8 : i32
    %131 = arith.muli %c5_i32, %c8_i32_37 : i32
    %132 = tpu.assume_multiple %131, 8 : i32
    %133 = arith.index_cast %132 : i32 to index
    %c0_38 = arith.constant 0 : index
    %134 = vector.load %arg18[%133, %c0_38] : memref<64x128xf32, #tpu.memory_space<vmem>>, vector<8x128xf32>
    %135 = arith.truncf %128 : vector<8x32xf32> to vector<8x32xbf16>
    %cst_39 = arith.constant dense<0.000000e+00> : vector<8x128xf32>
    %136 = tpu.matmul %135, %8, %cst_39 {dimension_numbers = #tpu.dot_dimension_numbers<[1], [0], [0], [1], [0, 0, 1, 1], [], []>} : vector<8x32xbf16>, vector<32x128xbf16>, vector<8x128xf32> -> vector<8x128xf32>
    %137 = arith.addf %134, %136 : vector<8x128xf32>
    %138 = arith.negf %137 : vector<8x128xf32>
    %139 = math.exp %138 : vector<8x128xf32>
    %cst_40 = arith.constant 1.000000e+00 : f32
    %140 = vector.broadcast %cst_40 : f32 to vector<8x128xf32>
    %141 = arith.addf %140, %139 : vector<8x128xf32>
    %142 = arith.divf %140, %141 : vector<8x128xf32>
    %143 = vector.extract_strided_slice %142 {offsets = [0, 0], sizes = [8, 32], strides = [1, 1]} : vector<8x128xf32> to vector<8x32xf32>
    %144 = vector.extract_strided_slice %142 {offsets = [0, 32], sizes = [8, 32], strides = [1, 1]} : vector<8x128xf32> to vector<8x32xf32>
    %145 = vector.extract_strided_slice %142 {offsets = [0, 64], sizes = [8, 32], strides = [1, 1]} : vector<8x128xf32> to vector<8x32xf32>
    %146 = vector.extract_strided_slice %137 {offsets = [0, 96], sizes = [8, 32], strides = [1, 1]} : vector<8x128xf32> to vector<8x32xf32>
    %147 = math.tanh %146 : vector<8x32xf32>
    %148 = arith.mulf %144, %126 : vector<8x32xf32>
    %149 = arith.mulf %143, %147 : vector<8x32xf32>
    %150 = arith.addf %148, %149 : vector<8x32xf32>
    %151 = math.tanh %150 : vector<8x32xf32>
    %152 = arith.mulf %145, %151 : vector<8x32xf32>
    %153 = arith.index_cast %132 : i32 to index
    %c0_41 = arith.constant 0 : index
    %154 = vector.load %arg19[%153, %c0_41] : memref<64x32xf32, #tpu.memory_space<vmem>>, vector<8x32xf32>
    tpu.vector_store %arg19[%153, %c0_41], %152 {strides = array<i32>} : memref<64x32xf32, #tpu.memory_space<vmem>>, vector<8x32xf32>,
    %c6_i32 = arith.constant 6 : i32
    %c8_i32_42 = arith.constant 8 : i32
    %155 = arith.muli %c6_i32, %c8_i32_42 : i32
    %156 = tpu.assume_multiple %155, 8 : i32
    %157 = arith.index_cast %156 : i32 to index
    %c0_43 = arith.constant 0 : index
    %158 = vector.load %arg18[%157, %c0_43] : memref<64x128xf32, #tpu.memory_space<vmem>>, vector<8x128xf32>
    %159 = arith.truncf %152 : vector<8x32xf32> to vector<8x32xbf16>
    %cst_44 = arith.constant dense<0.000000e+00> : vector<8x128xf32>
    %160 = tpu.matmul %159, %8, %cst_44 {dimension_numbers = #tpu.dot_dimension_numbers<[1], [0], [0], [1], [0, 0, 1, 1], [], []>} : vector<8x32xbf16>, vector<32x128xbf16>, vector<8x128xf32> -> vector<8x128xf32>
    %161 = arith.addf %158, %160 : vector<8x128xf32>
    %162 = arith.negf %161 : vector<8x128xf32>
    %163 = math.exp %162 : vector<8x128xf32>
    %cst_45 = arith.constant 1.000000e+00 : f32
    %164 = vector.broadcast %cst_45 : f32 to vector<8x128xf32>
    %165 = arith.addf %164, %163 : vector<8x128xf32>
    %166 = arith.divf %164, %165 : vector<8x128xf32>
    %167 = vector.extract_strided_slice %166 {offsets = [0, 0], sizes = [8, 32], strides = [1, 1]} : vector<8x128xf32> to vector<8x32xf32>
    %168 = vector.extract_strided_slice %166 {offsets = [0, 32], sizes = [8, 32], strides = [1, 1]} : vector<8x128xf32> to vector<8x32xf32>
    %169 = vector.extract_strided_slice %166 {offsets = [0, 64], sizes = [8, 32], strides = [1, 1]} : vector<8x128xf32> to vector<8x32xf32>
    %170 = vector.extract_strided_slice %161 {offsets = [0, 96], sizes = [8, 32], strides = [1, 1]} : vector<8x128xf32> to vector<8x32xf32>
    %171 = math.tanh %170 : vector<8x32xf32>
    %172 = arith.mulf %168, %150 : vector<8x32xf32>
    %173 = arith.mulf %167, %171 : vector<8x32xf32>
    %174 = arith.addf %172, %173 : vector<8x32xf32>
    %175 = math.tanh %174 : vector<8x32xf32>
    %176 = arith.mulf %169, %175 : vector<8x32xf32>
    %177 = arith.index_cast %156 : i32 to index
    %c0_46 = arith.constant 0 : index
    %178 = vector.load %arg19[%177, %c0_46] : memref<64x32xf32, #tpu.memory_space<vmem>>, vector<8x32xf32>
    tpu.vector_store %arg19[%177, %c0_46], %176 {strides = array<i32>} : memref<64x32xf32, #tpu.memory_space<vmem>>, vector<8x32xf32>,
    %c7_i32 = arith.constant 7 : i32
    %c8_i32_47 = arith.constant 8 : i32
    %179 = arith.muli %c7_i32, %c8_i32_47 : i32
    %180 = tpu.assume_multiple %179, 8 : i32
    %181 = arith.index_cast %180 : i32 to index
    %c0_48 = arith.constant 0 : index
    %182 = vector.load %arg18[%181, %c0_48] : memref<64x128xf32, #tpu.memory_space<vmem>>, vector<8x128xf32>
    %183 = arith.truncf %176 : vector<8x32xf32> to vector<8x32xbf16>
    %cst_49 = arith.constant dense<0.000000e+00> : vector<8x128xf32>
    %184 = tpu.matmul %183, %8, %cst_49 {dimension_numbers = #tpu.dot_dimension_numbers<[1], [0], [0], [1], [0, 0, 1, 1], [], []>} : vector<8x32xbf16>, vector<32x128xbf16>, vector<8x128xf32> -> vector<8x128xf32>
    %185 = arith.addf %182, %184 : vector<8x128xf32>
    %186 = arith.negf %185 : vector<8x128xf32>
    %187 = math.exp %186 : vector<8x128xf32>
    %cst_50 = arith.constant 1.000000e+00 : f32
    %188 = vector.broadcast %cst_50 : f32 to vector<8x128xf32>
    %189 = arith.addf %188, %187 : vector<8x128xf32>
    %190 = arith.divf %188, %189 : vector<8x128xf32>
    %191 = vector.extract_strided_slice %190 {offsets = [0, 0], sizes = [8, 32], strides = [1, 1]} : vector<8x128xf32> to vector<8x32xf32>
    %192 = vector.extract_strided_slice %190 {offsets = [0, 32], sizes = [8, 32], strides = [1, 1]} : vector<8x128xf32> to vector<8x32xf32>
    %193 = vector.extract_strided_slice %190 {offsets = [0, 64], sizes = [8, 32], strides = [1, 1]} : vector<8x128xf32> to vector<8x32xf32>
    %194 = vector.extract_strided_slice %185 {offsets = [0, 96], sizes = [8, 32], strides = [1, 1]} : vector<8x128xf32> to vector<8x32xf32>
    %195 = math.tanh %194 : vector<8x32xf32>
    %196 = arith.mulf %192, %174 : vector<8x32xf32>
    %197 = arith.mulf %191, %195 : vector<8x32xf32>
    %198 = arith.addf %196, %197 : vector<8x32xf32>
    %199 = math.tanh %198 : vector<8x32xf32>
    %200 = arith.mulf %193, %199 : vector<8x32xf32>
    %201 = arith.index_cast %180 : i32 to index
    %c0_51 = arith.constant 0 : index
    %202 = vector.load %arg19[%201, %c0_51] : memref<64x32xf32, #tpu.memory_space<vmem>>, vector<8x32xf32>
    tpu.vector_store %arg19[%201, %c0_51], %200 {strides = array<i32>} : memref<64x32xf32, #tpu.memory_space<vmem>>, vector<8x32xf32>,
    %c8_i32_52 = arith.constant 8 : i32
    %c0_53 = arith.constant 0 : index
    %c0_54 = arith.constant 0 : index
    %203 = vector.load %arg19[%c0_53, %c0_54] : memref<64x32xf32, #tpu.memory_space<vmem>>, vector<64x32xf32>
    %204 = arith.truncf %203 : vector<64x32xf32> to vector<64x32xbf16>
    %c0_55 = arith.constant 0 : index
    %c0_56 = arith.constant 0 : index
    %205 = vector.load %arg6[%c0_55, %c0_56] : memref<32x32xbf16, #tpu.memory_space<vmem>>, vector<32x32xbf16>
    %cst_57 = arith.constant dense<0.000000e+00> : vector<64x32xf32>
    %206 = tpu.matmul %204, %205, %cst_57 {dimension_numbers = #tpu.dot_dimension_numbers<[1], [0], [0], [1], [0, 0, 1, 1], [], []>} : vector<64x32xbf16>, vector<32x32xbf16>, vector<64x32xf32> -> vector<64x32xf32>
    %c0_58 = arith.constant 0 : index
    %c0_59 = arith.constant 0 : index
    %207 = vector.load %arg7[%c0_58, %c0_59] : memref<1x32xf32, #tpu.memory_space<vmem>>, vector<1x32xf32>
    %208 = vector.broadcast %207 : vector<1x32xf32> to vector<64x32xf32>
    %209 = arith.addf %206, %208 : vector<64x32xf32>
    %c0_60 = arith.constant 0 : index
    %c0_61 = arith.constant 0 : index
    %210 = vector.load %arg15[%c0_60, %c0_61] : memref<64x32xf32, #tpu.memory_space<vmem>>, vector<64x32xf32>
    tpu.vector_store %arg15[%c0_60, %c0_61], %209 {strides = array<i32>} : memref<64x32xf32, #tpu.memory_space<vmem>>, vector<64x32xf32>,
    %211 = vector.extract_strided_slice %209 {offsets = [0, 0], sizes = [64, 16], strides = [1, 1]} : vector<64x32xf32> to vector<64x16xf32>
    %212 = vector.extract_strided_slice %209 {offsets = [0, 16], sizes = [64, 16], strides = [1, 1]} : vector<64x32xf32> to vector<64x16xf32>
    %c0_62 = arith.constant 0 : index
    %c0_63 = arith.constant 0 : index
    %213 = vector.load %arg8[%c0_62, %c0_63] : memref<64x16xf32, #tpu.memory_space<vmem>>, vector<64x16xf32>
    %cst_64 = arith.constant 5.000000e-01 : f32
    %214 = vector.broadcast %cst_64 : f32 to vector<64x16xf32>
    %215 = arith.mulf %214, %212 : vector<64x16xf32>
    %216 = math.exp %215 : vector<64x16xf32>
    %217 = arith.mulf %213, %216 : vector<64x16xf32>
    %218 = arith.addf %211, %217 : vector<64x16xf32>
    %219 = arith.truncf %218 : vector<64x16xf32> to vector<64x16xbf16>
    %c0_65 = arith.constant 0 : index
    %c0_66 = arith.constant 0 : index
    %220 = vector.load %arg9[%c0_65, %c0_66] : memref<16x128xbf16, #tpu.memory_space<vmem>>, vector<16x128xbf16>
    %cst_67 = arith.constant dense<0.000000e+00> : vector<64x128xf32>
    %221 = tpu.matmul %219, %220, %cst_67 {dimension_numbers = #tpu.dot_dimension_numbers<[1], [0], [0], [1], [0, 0, 1, 1], [], []>} : vector<64x16xbf16>, vector<16x128xbf16>, vector<64x128xf32> -> vector<64x128xf32>
    %c0_68 = arith.constant 0 : index
    %c0_69 = arith.constant 0 : index
    %222 = vector.load %arg10[%c0_68, %c0_69] : memref<1x128xf32, #tpu.memory_space<vmem>>, vector<1x128xf32>
    %223 = vector.broadcast %222 : vector<1x128xf32> to vector<64x128xf32>
    %224 = arith.addf %221, %223 : vector<64x128xf32>
    %c0_70 = arith.constant 0 : index
    %c0_71 = arith.constant 0 : index
    %225 = vector.load %arg18[%c0_70, %c0_71] : memref<64x128xf32, #tpu.memory_space<vmem>>, vector<64x128xf32>
    tpu.vector_store %arg18[%c0_70, %c0_71], %224 {strides = array<i32>} : memref<64x128xf32, #tpu.memory_space<vmem>>, vector<64x128xf32>,
    %c0_72 = arith.constant 0 : index
    %c0_73 = arith.constant 0 : index
    %226 = vector.load %arg11[%c0_72, %c0_73] : memref<32x128xbf16, #tpu.memory_space<vmem>>, vector<32x128xbf16>
    %c0_i32_74 = arith.constant 0 : i32
    %c8_i32_75 = arith.constant 8 : i32
    %227 = arith.muli %c0_i32_74, %c8_i32_75 : i32
    %228 = tpu.assume_multiple %227, 8 : i32
    %229 = arith.index_cast %228 : i32 to index
    %c0_76 = arith.constant 0 : index
    %230 = vector.load %arg18[%229, %c0_76] : memref<64x128xf32, #tpu.memory_space<vmem>>, vector<8x128xf32>
    %231 = arith.truncf %200 : vector<8x32xf32> to vector<8x32xbf16>
    %cst_77 = arith.constant dense<0.000000e+00> : vector<8x128xf32>
    %232 = tpu.matmul %231, %226, %cst_77 {dimension_numbers = #tpu.dot_dimension_numbers<[1], [0], [0], [1], [0, 0, 1, 1], [], []>} : vector<8x32xbf16>, vector<32x128xbf16>, vector<8x128xf32> -> vector<8x128xf32>
    %233 = arith.addf %230, %232 : vector<8x128xf32>
    %234 = arith.negf %233 : vector<8x128xf32>
    %235 = math.exp %234 : vector<8x128xf32>
    %cst_78 = arith.constant 1.000000e+00 : f32
    %236 = vector.broadcast %cst_78 : f32 to vector<8x128xf32>
    %237 = arith.addf %236, %235 : vector<8x128xf32>
    %238 = arith.divf %236, %237 : vector<8x128xf32>
    %239 = vector.extract_strided_slice %238 {offsets = [0, 0], sizes = [8, 32], strides = [1, 1]} : vector<8x128xf32> to vector<8x32xf32>
    %240 = vector.extract_strided_slice %238 {offsets = [0, 32], sizes = [8, 32], strides = [1, 1]} : vector<8x128xf32> to vector<8x32xf32>
    %241 = vector.extract_strided_slice %238 {offsets = [0, 64], sizes = [8, 32], strides = [1, 1]} : vector<8x128xf32> to vector<8x32xf32>
    %242 = vector.extract_strided_slice %233 {offsets = [0, 96], sizes = [8, 32], strides = [1, 1]} : vector<8x128xf32> to vector<8x32xf32>
    %243 = math.tanh %242 : vector<8x32xf32>
    %244 = arith.mulf %240, %198 : vector<8x32xf32>
    %245 = arith.mulf %239, %243 : vector<8x32xf32>
    %246 = arith.addf %244, %245 : vector<8x32xf32>
    %247 = math.tanh %246 : vector<8x32xf32>
    %248 = arith.mulf %241, %247 : vector<8x32xf32>
    %249 = arith.index_cast %228 : i32 to index
    %c0_79 = arith.constant 0 : index
    %250 = vector.load %arg19[%249, %c0_79] : memref<64x32xf32, #tpu.memory_space<vmem>>, vector<8x32xf32>
    tpu.vector_store %arg19[%249, %c0_79], %248 {strides = array<i32>} : memref<64x32xf32, #tpu.memory_space<vmem>>, vector<8x32xf32>,
    %c1_i32_80 = arith.constant 1 : i32
    %c8_i32_81 = arith.constant 8 : i32
    %251 = arith.muli %c1_i32_80, %c8_i32_81 : i32
    %252 = tpu.assume_multiple %251, 8 : i32
    %253 = arith.index_cast %252 : i32 to index
    %c0_82 = arith.constant 0 : index
    %254 = vector.load %arg18[%253, %c0_82] : memref<64x128xf32, #tpu.memory_space<vmem>>, vector<8x128xf32>
    %255 = arith.truncf %248 : vector<8x32xf32> to vector<8x32xbf16>
    %cst_83 = arith.constant dense<0.000000e+00> : vector<8x128xf32>
    %256 = tpu.matmul %255, %226, %cst_83 {dimension_numbers = #tpu.dot_dimension_numbers<[1], [0], [0], [1], [0, 0, 1, 1], [], []>} : vector<8x32xbf16>, vector<32x128xbf16>, vector<8x128xf32> -> vector<8x128xf32>
    %257 = arith.addf %254, %256 : vector<8x128xf32>
    %258 = arith.negf %257 : vector<8x128xf32>
    %259 = math.exp %258 : vector<8x128xf32>
    %cst_84 = arith.constant 1.000000e+00 : f32
    %260 = vector.broadcast %cst_84 : f32 to vector<8x128xf32>
    %261 = arith.addf %260, %259 : vector<8x128xf32>
    %262 = arith.divf %260, %261 : vector<8x128xf32>
    %263 = vector.extract_strided_slice %262 {offsets = [0, 0], sizes = [8, 32], strides = [1, 1]} : vector<8x128xf32> to vector<8x32xf32>
    %264 = vector.extract_strided_slice %262 {offsets = [0, 32], sizes = [8, 32], strides = [1, 1]} : vector<8x128xf32> to vector<8x32xf32>
    %265 = vector.extract_strided_slice %262 {offsets = [0, 64], sizes = [8, 32], strides = [1, 1]} : vector<8x128xf32> to vector<8x32xf32>
    %266 = vector.extract_strided_slice %257 {offsets = [0, 96], sizes = [8, 32], strides = [1, 1]} : vector<8x128xf32> to vector<8x32xf32>
    %267 = math.tanh %266 : vector<8x32xf32>
    %268 = arith.mulf %264, %246 : vector<8x32xf32>
    %269 = arith.mulf %263, %267 : vector<8x32xf32>
    %270 = arith.addf %268, %269 : vector<8x32xf32>
    %271 = math.tanh %270 : vector<8x32xf32>
    %272 = arith.mulf %265, %271 : vector<8x32xf32>
    %273 = arith.index_cast %252 : i32 to index
    %c0_85 = arith.constant 0 : index
    %274 = vector.load %arg19[%273, %c0_85] : memref<64x32xf32, #tpu.memory_space<vmem>>, vector<8x32xf32>
    tpu.vector_store %arg19[%273, %c0_85], %272 {strides = array<i32>} : memref<64x32xf32, #tpu.memory_space<vmem>>, vector<8x32xf32>,
    %c2_i32_86 = arith.constant 2 : i32
    %c8_i32_87 = arith.constant 8 : i32
    %275 = arith.muli %c2_i32_86, %c8_i32_87 : i32
    %276 = tpu.assume_multiple %275, 8 : i32
    %277 = arith.index_cast %276 : i32 to index
    %c0_88 = arith.constant 0 : index
    %278 = vector.load %arg18[%277, %c0_88] : memref<64x128xf32, #tpu.memory_space<vmem>>, vector<8x128xf32>
    %279 = arith.truncf %272 : vector<8x32xf32> to vector<8x32xbf16>
    %cst_89 = arith.constant dense<0.000000e+00> : vector<8x128xf32>
    %280 = tpu.matmul %279, %226, %cst_89 {dimension_numbers = #tpu.dot_dimension_numbers<[1], [0], [0], [1], [0, 0, 1, 1], [], []>} : vector<8x32xbf16>, vector<32x128xbf16>, vector<8x128xf32> -> vector<8x128xf32>
    %281 = arith.addf %278, %280 : vector<8x128xf32>
    %282 = arith.negf %281 : vector<8x128xf32>
    %283 = math.exp %282 : vector<8x128xf32>
    %cst_90 = arith.constant 1.000000e+00 : f32
    %284 = vector.broadcast %cst_90 : f32 to vector<8x128xf32>
    %285 = arith.addf %284, %283 : vector<8x128xf32>
    %286 = arith.divf %284, %285 : vector<8x128xf32>
    %287 = vector.extract_strided_slice %286 {offsets = [0, 0], sizes = [8, 32], strides = [1, 1]} : vector<8x128xf32> to vector<8x32xf32>
    %288 = vector.extract_strided_slice %286 {offsets = [0, 32], sizes = [8, 32], strides = [1, 1]} : vector<8x128xf32> to vector<8x32xf32>
    %289 = vector.extract_strided_slice %286 {offsets = [0, 64], sizes = [8, 32], strides = [1, 1]} : vector<8x128xf32> to vector<8x32xf32>
    %290 = vector.extract_strided_slice %281 {offsets = [0, 96], sizes = [8, 32], strides = [1, 1]} : vector<8x128xf32> to vector<8x32xf32>
    %291 = math.tanh %290 : vector<8x32xf32>
    %292 = arith.mulf %288, %270 : vector<8x32xf32>
    %293 = arith.mulf %287, %291 : vector<8x32xf32>
    %294 = arith.addf %292, %293 : vector<8x32xf32>
    %295 = math.tanh %294 : vector<8x32xf32>
    %296 = arith.mulf %289, %295 : vector<8x32xf32>
    %297 = arith.index_cast %276 : i32 to index
    %c0_91 = arith.constant 0 : index
    %298 = vector.load %arg19[%297, %c0_91] : memref<64x32xf32, #tpu.memory_space<vmem>>, vector<8x32xf32>
    tpu.vector_store %arg19[%297, %c0_91], %296 {strides = array<i32>} : memref<64x32xf32, #tpu.memory_space<vmem>>, vector<8x32xf32>,
    %c3_i32_92 = arith.constant 3 : i32
    %c8_i32_93 = arith.constant 8 : i32
    %299 = arith.muli %c3_i32_92, %c8_i32_93 : i32
    %300 = tpu.assume_multiple %299, 8 : i32
    %301 = arith.index_cast %300 : i32 to index
    %c0_94 = arith.constant 0 : index
    %302 = vector.load %arg18[%301, %c0_94] : memref<64x128xf32, #tpu.memory_space<vmem>>, vector<8x128xf32>
    %303 = arith.truncf %296 : vector<8x32xf32> to vector<8x32xbf16>
    %cst_95 = arith.constant dense<0.000000e+00> : vector<8x128xf32>
    %304 = tpu.matmul %303, %226, %cst_95 {dimension_numbers = #tpu.dot_dimension_numbers<[1], [0], [0], [1], [0, 0, 1, 1], [], []>} : vector<8x32xbf16>, vector<32x128xbf16>, vector<8x128xf32> -> vector<8x128xf32>
    %305 = arith.addf %302, %304 : vector<8x128xf32>
    %306 = arith.negf %305 : vector<8x128xf32>
    %307 = math.exp %306 : vector<8x128xf32>
    %cst_96 = arith.constant 1.000000e+00 : f32
    %308 = vector.broadcast %cst_96 : f32 to vector<8x128xf32>
    %309 = arith.addf %308, %307 : vector<8x128xf32>
    %310 = arith.divf %308, %309 : vector<8x128xf32>
    %311 = vector.extract_strided_slice %310 {offsets = [0, 0], sizes = [8, 32], strides = [1, 1]} : vector<8x128xf32> to vector<8x32xf32>
    %312 = vector.extract_strided_slice %310 {offsets = [0, 32], sizes = [8, 32], strides = [1, 1]} : vector<8x128xf32> to vector<8x32xf32>
    %313 = vector.extract_strided_slice %310 {offsets = [0, 64], sizes = [8, 32], strides = [1, 1]} : vector<8x128xf32> to vector<8x32xf32>
    %314 = vector.extract_strided_slice %305 {offsets = [0, 96], sizes = [8, 32], strides = [1, 1]} : vector<8x128xf32> to vector<8x32xf32>
    %315 = math.tanh %314 : vector<8x32xf32>
    %316 = arith.mulf %312, %294 : vector<8x32xf32>
    %317 = arith.mulf %311, %315 : vector<8x32xf32>
    %318 = arith.addf %316, %317 : vector<8x32xf32>
    %319 = math.tanh %318 : vector<8x32xf32>
    %320 = arith.mulf %313, %319 : vector<8x32xf32>
    %321 = arith.index_cast %300 : i32 to index
    %c0_97 = arith.constant 0 : index
    %322 = vector.load %arg19[%321, %c0_97] : memref<64x32xf32, #tpu.memory_space<vmem>>, vector<8x32xf32>
    tpu.vector_store %arg19[%321, %c0_97], %320 {strides = array<i32>} : memref<64x32xf32, #tpu.memory_space<vmem>>, vector<8x32xf32>,
    %c4_i32_98 = arith.constant 4 : i32
    %c8_i32_99 = arith.constant 8 : i32
    %323 = arith.muli %c4_i32_98, %c8_i32_99 : i32
    %324 = tpu.assume_multiple %323, 8 : i32
    %325 = arith.index_cast %324 : i32 to index
    %c0_100 = arith.constant 0 : index
    %326 = vector.load %arg18[%325, %c0_100] : memref<64x128xf32, #tpu.memory_space<vmem>>, vector<8x128xf32>
    %327 = arith.truncf %320 : vector<8x32xf32> to vector<8x32xbf16>
    %cst_101 = arith.constant dense<0.000000e+00> : vector<8x128xf32>
    %328 = tpu.matmul %327, %226, %cst_101 {dimension_numbers = #tpu.dot_dimension_numbers<[1], [0], [0], [1], [0, 0, 1, 1], [], []>} : vector<8x32xbf16>, vector<32x128xbf16>, vector<8x128xf32> -> vector<8x128xf32>
    %329 = arith.addf %326, %328 : vector<8x128xf32>
    %330 = arith.negf %329 : vector<8x128xf32>
    %331 = math.exp %330 : vector<8x128xf32>
    %cst_102 = arith.constant 1.000000e+00 : f32
    %332 = vector.broadcast %cst_102 : f32 to vector<8x128xf32>
    %333 = arith.addf %332, %331 : vector<8x128xf32>
    %334 = arith.divf %332, %333 : vector<8x128xf32>
    %335 = vector.extract_strided_slice %334 {offsets = [0, 0], sizes = [8, 32], strides = [1, 1]} : vector<8x128xf32> to vector<8x32xf32>
    %336 = vector.extract_strided_slice %334 {offsets = [0, 32], sizes = [8, 32], strides = [1, 1]} : vector<8x128xf32> to vector<8x32xf32>
    %337 = vector.extract_strided_slice %334 {offsets = [0, 64], sizes = [8, 32], strides = [1, 1]} : vector<8x128xf32> to vector<8x32xf32>
    %338 = vector.extract_strided_slice %329 {offsets = [0, 96], sizes = [8, 32], strides = [1, 1]} : vector<8x128xf32> to vector<8x32xf32>
    %339 = math.tanh %338 : vector<8x32xf32>
    %340 = arith.mulf %336, %318 : vector<8x32xf32>
    %341 = arith.mulf %335, %339 : vector<8x32xf32>
    %342 = arith.addf %340, %341 : vector<8x32xf32>
    %343 = math.tanh %342 : vector<8x32xf32>
    %344 = arith.mulf %337, %343 : vector<8x32xf32>
    %345 = arith.index_cast %324 : i32 to index
    %c0_103 = arith.constant 0 : index
    %346 = vector.load %arg19[%345, %c0_103] : memref<64x32xf32, #tpu.memory_space<vmem>>, vector<8x32xf32>
    tpu.vector_store %arg19[%345, %c0_103], %344 {strides = array<i32>} : memref<64x32xf32, #tpu.memory_space<vmem>>, vector<8x32xf32>,
    %c5_i32_104 = arith.constant 5 : i32
    %c8_i32_105 = arith.constant 8 : i32
    %347 = arith.muli %c5_i32_104, %c8_i32_105 : i32
    %348 = tpu.assume_multiple %347, 8 : i32
    %349 = arith.index_cast %348 : i32 to index
    %c0_106 = arith.constant 0 : index
    %350 = vector.load %arg18[%349, %c0_106] : memref<64x128xf32, #tpu.memory_space<vmem>>, vector<8x128xf32>
    %351 = arith.truncf %344 : vector<8x32xf32> to vector<8x32xbf16>
    %cst_107 = arith.constant dense<0.000000e+00> : vector<8x128xf32>
    %352 = tpu.matmul %351, %226, %cst_107 {dimension_numbers = #tpu.dot_dimension_numbers<[1], [0], [0], [1], [0, 0, 1, 1], [], []>} : vector<8x32xbf16>, vector<32x128xbf16>, vector<8x128xf32> -> vector<8x128xf32>
    %353 = arith.addf %350, %352 : vector<8x128xf32>
    %354 = arith.negf %353 : vector<8x128xf32>
    %355 = math.exp %354 : vector<8x128xf32>
    %cst_108 = arith.constant 1.000000e+00 : f32
    %356 = vector.broadcast %cst_108 : f32 to vector<8x128xf32>
    %357 = arith.addf %356, %355 : vector<8x128xf32>
    %358 = arith.divf %356, %357 : vector<8x128xf32>
    %359 = vector.extract_strided_slice %358 {offsets = [0, 0], sizes = [8, 32], strides = [1, 1]} : vector<8x128xf32> to vector<8x32xf32>
    %360 = vector.extract_strided_slice %358 {offsets = [0, 32], sizes = [8, 32], strides = [1, 1]} : vector<8x128xf32> to vector<8x32xf32>
    %361 = vector.extract_strided_slice %358 {offsets = [0, 64], sizes = [8, 32], strides = [1, 1]} : vector<8x128xf32> to vector<8x32xf32>
    %362 = vector.extract_strided_slice %353 {offsets = [0, 96], sizes = [8, 32], strides = [1, 1]} : vector<8x128xf32> to vector<8x32xf32>
    %363 = math.tanh %362 : vector<8x32xf32>
    %364 = arith.mulf %360, %342 : vector<8x32xf32>
    %365 = arith.mulf %359, %363 : vector<8x32xf32>
    %366 = arith.addf %364, %365 : vector<8x32xf32>
    %367 = math.tanh %366 : vector<8x32xf32>
    %368 = arith.mulf %361, %367 : vector<8x32xf32>
    %369 = arith.index_cast %348 : i32 to index
    %c0_109 = arith.constant 0 : index
    %370 = vector.load %arg19[%369, %c0_109] : memref<64x32xf32, #tpu.memory_space<vmem>>, vector<8x32xf32>
    tpu.vector_store %arg19[%369, %c0_109], %368 {strides = array<i32>} : memref<64x32xf32, #tpu.memory_space<vmem>>, vector<8x32xf32>,
    %c6_i32_110 = arith.constant 6 : i32
    %c8_i32_111 = arith.constant 8 : i32
    %371 = arith.muli %c6_i32_110, %c8_i32_111 : i32
    %372 = tpu.assume_multiple %371, 8 : i32
    %373 = arith.index_cast %372 : i32 to index
    %c0_112 = arith.constant 0 : index
    %374 = vector.load %arg18[%373, %c0_112] : memref<64x128xf32, #tpu.memory_space<vmem>>, vector<8x128xf32>
    %375 = arith.truncf %368 : vector<8x32xf32> to vector<8x32xbf16>
    %cst_113 = arith.constant dense<0.000000e+00> : vector<8x128xf32>
    %376 = tpu.matmul %375, %226, %cst_113 {dimension_numbers = #tpu.dot_dimension_numbers<[1], [0], [0], [1], [0, 0, 1, 1], [], []>} : vector<8x32xbf16>, vector<32x128xbf16>, vector<8x128xf32> -> vector<8x128xf32>
    %377 = arith.addf %374, %376 : vector<8x128xf32>
    %378 = arith.negf %377 : vector<8x128xf32>
    %379 = math.exp %378 : vector<8x128xf32>
    %cst_114 = arith.constant 1.000000e+00 : f32
    %380 = vector.broadcast %cst_114 : f32 to vector<8x128xf32>
    %381 = arith.addf %380, %379 : vector<8x128xf32>
    %382 = arith.divf %380, %381 : vector<8x128xf32>
    %383 = vector.extract_strided_slice %382 {offsets = [0, 0], sizes = [8, 32], strides = [1, 1]} : vector<8x128xf32> to vector<8x32xf32>
    %384 = vector.extract_strided_slice %382 {offsets = [0, 32], sizes = [8, 32], strides = [1, 1]} : vector<8x128xf32> to vector<8x32xf32>
    %385 = vector.extract_strided_slice %382 {offsets = [0, 64], sizes = [8, 32], strides = [1, 1]} : vector<8x128xf32> to vector<8x32xf32>
    %386 = vector.extract_strided_slice %377 {offsets = [0, 96], sizes = [8, 32], strides = [1, 1]} : vector<8x128xf32> to vector<8x32xf32>
    %387 = math.tanh %386 : vector<8x32xf32>
    %388 = arith.mulf %384, %366 : vector<8x32xf32>
    %389 = arith.mulf %383, %387 : vector<8x32xf32>
    %390 = arith.addf %388, %389 : vector<8x32xf32>
    %391 = math.tanh %390 : vector<8x32xf32>
    %392 = arith.mulf %385, %391 : vector<8x32xf32>
    %393 = arith.index_cast %372 : i32 to index
    %c0_115 = arith.constant 0 : index
    %394 = vector.load %arg19[%393, %c0_115] : memref<64x32xf32, #tpu.memory_space<vmem>>, vector<8x32xf32>
    tpu.vector_store %arg19[%393, %c0_115], %392 {strides = array<i32>} : memref<64x32xf32, #tpu.memory_space<vmem>>, vector<8x32xf32>,
    %c7_i32_116 = arith.constant 7 : i32
    %c8_i32_117 = arith.constant 8 : i32
    %395 = arith.muli %c7_i32_116, %c8_i32_117 : i32
    %396 = tpu.assume_multiple %395, 8 : i32
    %397 = arith.index_cast %396 : i32 to index
    %c0_118 = arith.constant 0 : index
    %398 = vector.load %arg18[%397, %c0_118] : memref<64x128xf32, #tpu.memory_space<vmem>>, vector<8x128xf32>
    %399 = arith.truncf %392 : vector<8x32xf32> to vector<8x32xbf16>
    %cst_119 = arith.constant dense<0.000000e+00> : vector<8x128xf32>
    %400 = tpu.matmul %399, %226, %cst_119 {dimension_numbers = #tpu.dot_dimension_numbers<[1], [0], [0], [1], [0, 0, 1, 1], [], []>} : vector<8x32xbf16>, vector<32x128xbf16>, vector<8x128xf32> -> vector<8x128xf32>
    %401 = arith.addf %398, %400 : vector<8x128xf32>
    %402 = arith.negf %401 : vector<8x128xf32>
    %403 = math.exp %402 : vector<8x128xf32>
    %cst_120 = arith.constant 1.000000e+00 : f32
    %404 = vector.broadcast %cst_120 : f32 to vector<8x128xf32>
    %405 = arith.addf %404, %403 : vector<8x128xf32>
    %406 = arith.divf %404, %405 : vector<8x128xf32>
    %407 = vector.extract_strided_slice %406 {offsets = [0, 0], sizes = [8, 32], strides = [1, 1]} : vector<8x128xf32> to vector<8x32xf32>
    %408 = vector.extract_strided_slice %406 {offsets = [0, 32], sizes = [8, 32], strides = [1, 1]} : vector<8x128xf32> to vector<8x32xf32>
    %409 = vector.extract_strided_slice %406 {offsets = [0, 64], sizes = [8, 32], strides = [1, 1]} : vector<8x128xf32> to vector<8x32xf32>
    %410 = vector.extract_strided_slice %401 {offsets = [0, 96], sizes = [8, 32], strides = [1, 1]} : vector<8x128xf32> to vector<8x32xf32>
    %411 = math.tanh %410 : vector<8x32xf32>
    %412 = arith.mulf %408, %390 : vector<8x32xf32>
    %413 = arith.mulf %407, %411 : vector<8x32xf32>
    %414 = arith.addf %412, %413 : vector<8x32xf32>
    %415 = math.tanh %414 : vector<8x32xf32>
    %416 = arith.mulf %409, %415 : vector<8x32xf32>
    %417 = arith.index_cast %396 : i32 to index
    %c0_121 = arith.constant 0 : index
    %418 = vector.load %arg19[%417, %c0_121] : memref<64x32xf32, #tpu.memory_space<vmem>>, vector<8x32xf32>
    tpu.vector_store %arg19[%417, %c0_121], %416 {strides = array<i32>} : memref<64x32xf32, #tpu.memory_space<vmem>>, vector<8x32xf32>,
    %c8_i32_122 = arith.constant 8 : i32
    %c0_123 = arith.constant 0 : index
    %c0_124 = arith.constant 0 : index
    %419 = vector.load %arg19[%c0_123, %c0_124] : memref<64x32xf32, #tpu.memory_space<vmem>>, vector<64x32xf32>
    %420 = arith.truncf %419 : vector<64x32xf32> to vector<64x32xbf16>
    %c0_125 = arith.constant 0 : index
    %c0_126 = arith.constant 0 : index
    %421 = vector.load %arg12[%c0_125, %c0_126] : memref<32x16xbf16, #tpu.memory_space<vmem>>, vector<32x16xbf16>
    %cst_127 = arith.constant dense<0.000000e+00> : vector<64x16xf32>
    %422 = tpu.matmul %420, %421, %cst_127 {dimension_numbers = #tpu.dot_dimension_numbers<[1], [0], [0], [1], [0, 0, 1, 1], [], []>} : vector<64x32xbf16>, vector<32x16xbf16>, vector<64x16xf32> -> vector<64x16xf32>
    %c0_128 = arith.constant 0 : index
    %c0_129 = arith.constant 0 : index
    %423 = vector.load %arg13[%c0_128, %c0_129] : memref<1x16xf32, #tpu.memory_space<vmem>>, vector<1x16xf32>
    %424 = vector.broadcast %423 : vector<1x16xf32> to vector<64x16xf32>
    %425 = arith.addf %422, %424 : vector<64x16xf32>
    %426 = arith.negf %425 : vector<64x16xf32>
    %427 = math.exp %426 : vector<64x16xf32>
    %cst_130 = arith.constant 1.000000e+00 : f32
    %428 = vector.broadcast %cst_130 : f32 to vector<64x16xf32>
    %429 = arith.addf %428, %427 : vector<64x16xf32>
    %430 = arith.divf %428, %429 : vector<64x16xf32>
    %c0_131 = arith.constant 0 : index
    %c0_132 = arith.constant 0 : index
    %431 = vector.load %arg14[%c0_131, %c0_132] : memref<64x16xf32, #tpu.memory_space<vmem>>, vector<64x16xf32>
    tpu.vector_store %arg14[%c0_131, %c0_132], %430 {strides = array<i32>} : memref<64x16xf32, #tpu.memory_space<vmem>>, vector<64x16xf32>,
    %c0_133 = arith.constant 0 : index
    %c0_134 = arith.constant 0 : index
    %432 = vector.load %arg16[%c0_133, %c0_134] : memref<8x32xf32, #tpu.memory_space<vmem>>, vector<8x32xf32>
    tpu.vector_store %arg16[%c0_133, %c0_134], %416 {strides = array<i32>} : memref<8x32xf32, #tpu.memory_space<vmem>>, vector<8x32xf32>,
    %c0_135 = arith.constant 0 : index
    %c0_136 = arith.constant 0 : index
    %433 = vector.load %arg17[%c0_135, %c0_136] : memref<8x32xf32, #tpu.memory_space<vmem>>, vector<8x32xf32>
    tpu.vector_store %arg17[%c0_135, %c0_136], %414 {strides = array<i32>} : memref<8x32xf32, #tpu.memory_space<vmem>>, vector<8x32xf32>,
    return
  }
}

</mosaic_0001>

<llo_original>
// kernel: rnn_autoencoder_forward.1
$region0: #{rnn_autoencoder_forward.1}
  #allocation0 [shape = 'u32[]', space=smem, size = 0x4, offset = 0x4, fixed_abs, tag = 'smem constant byte address 0x4 - core index']
  #allocation1 [shape = 'u32[144,128]{1,0:T(1,128)}', space=vmem, size = 0x12000, scoped, tag = 'internal scratch']
  #allocation2 [shape = 'f32[64,128]{1,0:T(8,128)}', space=vmem, size = 0x8000, scoped, tag = 'scratch operand']
  #allocation3 [shape = 'f32[64,32]{1,0:T(8,128)}', space=vmem, size = 0x8000, scoped, tag = 'scratch operand']
  %s0 = inlined_call_operand.vmem [shape: f32[64,16], index: 0, kind: input, shape index: {}]
  %s1 = inlined_call_operand.vmem [shape: f32[8,32], index: 1, kind: input, shape index: {}]
  %s2 = inlined_call_operand.vmem [shape: f32[8,32], index: 2, kind: input, shape index: {}]
  %s3 = inlined_call_operand.vmem [shape: bf16[16,128], index: 3, kind: input, shape index: {}]
  %s4 = inlined_call_operand.vmem [shape: bf16[32,128], index: 4, kind: input, shape index: {}]
  %s5 = inlined_call_operand.vmem [shape: f32[1,128], index: 5, kind: input, shape index: {}]
  %s6 = inlined_call_operand.vmem [shape: bf16[32,32], index: 6, kind: input, shape index: {}]
  %s7 = inlined_call_operand.vmem [shape: f32[1,32], index: 7, kind: input, shape index: {}]
  %s8 = inlined_call_operand.vmem [shape: f32[64,16], index: 8, kind: input, shape index: {}]
  %s9 = inlined_call_operand.vmem [shape: bf16[16,128], index: 9, kind: input, shape index: {}]
  %s10 = inlined_call_operand.vmem [shape: f32[1,128], index: 10, kind: input, shape index: {}]
  %s11 = inlined_call_operand.vmem [shape: bf16[32,128], index: 11, kind: input, shape index: {}]
  %s12 = inlined_call_operand.vmem [shape: bf16[32,16], index: 12, kind: input, shape index: {}]
  %s13 = inlined_call_operand.vmem [shape: f32[1,16], index: 13, kind: input, shape index: {}]
  %s14 = inlined_call_operand.vmem [shape: f32[64,16], index: 14, kind: output, shape index: {0}]
  %s15 = inlined_call_operand.vmem [shape: f32[64,32], index: 15, kind: output, shape index: {1}]
  %s16 = inlined_call_operand.hbm [shape: f32[8,32], index: 16, kind: output, shape index: {2}]
  %s17 = inlined_call_operand.hbm [shape: f32[8,32], index: 17, kind: output, shape index: {3}]
  %18 = xla_tuple %s14, %s15, %s16, %s17
  %s19 = sld [smem:[#allocation0]]
  $region90: #{rnn_autoencoder_forward.1} parent=0
    _
  %s21 = ssub.s32 1, %s19
  %s22 = scalar_select 0, %s21, %s19
  $region1: #{rnn_autoencoder_forward.1} parent=0
    #allocation4 [shape = 'u8[4096]{0}', space=vmem, size = 0x1000, scoped, tag = 'output window, operand 2, single buffered']
    #allocation5 [shape = 's32[1]{0}', space=sflag, size = 0x4, scoped, tag = 'scoped memory for rnn_autoencoder_forward.1']
    #allocation6 [shape = 'u8[4096]{0}', space=vmem, size = 0x1000, scoped, tag = 'output window, operand 3, single buffered']
    #allocation7 [shape = 's32[1]{0}', space=sflag, size = 0x4, scoped, tag = 'scoped memory for rnn_autoencoder_forward.1']
    %23 = vsyncpa [#allocation5], 0
    %24 = vsyncpa [#allocation7], 0
    // Predicated region
    $region2: #{rnn_autoencoder_forward.1} parent=1 // pred_check
      _
    $region3: #{rnn_autoencoder_forward.1} parent=1 // pred_check_branch
      %26 = sbr.rel (0) target = $region5
    $region4: #{rnn_autoencoder_forward.1} parent=1 // pred_region
      _
    $region5: #{rnn_autoencoder_forward.1} parent=1 // pred_fallthru
      _
    // Predicated region
    $region6: #{rnn_autoencoder_forward.1} parent=1 // pred_check
      _
    $region7: #{rnn_autoencoder_forward.1} parent=1 // pred_check_branch
      %28 = sbr.rel (0) target = $region9
    $region8: #{rnn_autoencoder_forward.1} parent=1 // pred_region
      _
    $region9: #{rnn_autoencoder_forward.1} parent=1 // pred_fallthru
      _
    // Predicated region
    $region10: #{rnn_autoencoder_forward.1} parent=1 // pred_check
      _
    $region11: #{rnn_autoencoder_forward.1} parent=1 // pred_check_branch
      %30 = sbr.rel (0) target = $region13
    $region12: #{rnn_autoencoder_forward.1} parent=1 // pred_region
      _
    $region13: #{rnn_autoencoder_forward.1} parent=1 // pred_fallthru
      _
    // Predicated region
    $region14: #{rnn_autoencoder_forward.1} parent=1 // pred_check
      _
    $region15: #{rnn_autoencoder_forward.1} parent=1 // pred_check_branch
      %32 = sbr.rel (0) target = $region17
    $region16: #{rnn_autoencoder_forward.1} parent=1 // pred_region
      _
    $region17: #{rnn_autoencoder_forward.1} parent=1 // pred_fallthru
      _
    // Predicated region
    $region18: #{rnn_autoencoder_forward.1} parent=1 // pred_check
      _
    $region19: #{rnn_autoencoder_forward.1} parent=1 // pred_check_branch
      %34 = sbr.rel (0) target = $region21
    $region20: #{rnn_autoencoder_forward.1} parent=1 // pred_region
      _
    $region21: #{rnn_autoencoder_forward.1} parent=1 // pred_fallthru
      _
    // Predicated region
    $region22: #{rnn_autoencoder_forward.1} parent=1 // pred_check
      _
    $region23: #{rnn_autoencoder_forward.1} parent=1 // pred_check_branch
      %36 = sbr.rel (0) target = $region25
    $region24: #{rnn_autoencoder_forward.1} parent=1 // pred_region
      _
    $region25: #{rnn_autoencoder_forward.1} parent=1 // pred_fallthru
      _
    // Predicated region
    $region26: #{rnn_autoencoder_forward.1} parent=1 // pred_check
      _
    $region27: #{rnn_autoencoder_forward.1} parent=1 // pred_check_branch
      %38 = sbr.rel (0) target = $region29
    $region28: #{rnn_autoencoder_forward.1} parent=1 // pred_region
      _
    $region29: #{rnn_autoencoder_forward.1} parent=1 // pred_fallthru
      _
    // Predicated region
    $region30: #{rnn_autoencoder_forward.1} parent=1 // pred_check
      _
    $region31: #{rnn_autoencoder_forward.1} parent=1 // pred_check_branch
      %40 = sbr.rel (0) target = $region33
    $region32: #{rnn_autoencoder_forward.1} parent=1 // pred_region
      _
    $region33: #{rnn_autoencoder_forward.1} parent=1 // pred_fallthru
      _
    // Predicated region
    $region34: #{rnn_autoencoder_forward.1} parent=1 // pred_check
      _
    $region35: #{rnn_autoencoder_forward.1} parent=1 // pred_check_branch
      %42 = sbr.rel (0) target = $region37
    $region36: #{rnn_autoencoder_forward.1} parent=1 // pred_region
      _
    $region37: #{rnn_autoencoder_forward.1} parent=1 // pred_fallthru
      _
    // Predicated region
    $region38: #{rnn_autoencoder_forward.1} parent=1 // pred_check
      _
    $region39: #{rnn_autoencoder_forward.1} parent=1 // pred_check_branch
      %44 = sbr.rel (0) target = $region41
    $region40: #{rnn_autoencoder_forward.1} parent=1 // pred_region
      _
    $region41: #{rnn_autoencoder_forward.1} parent=1 // pred_fallthru
      _
    // Predicated region
    $region42: #{rnn_autoencoder_forward.1} parent=1 // pred_check
      _
    $region43: #{rnn_autoencoder_forward.1} parent=1 // pred_check_branch
      %46 = sbr.rel (0) target = $region45
    $region44: #{rnn_autoencoder_forward.1} parent=1 // pred_region
      _
    $region45: #{rnn_autoencoder_forward.1} parent=1 // pred_fallthru
      _
    // Predicated region
    $region46: #{rnn_autoencoder_forward.1} parent=1 // pred_check
      _
    $region47: #{rnn_autoencoder_forward.1} parent=1 // pred_check_branch
      %48 = sbr.rel (0) target = $region49
    $region48: #{rnn_autoencoder_forward.1} parent=1 // pred_region
      _
    $region49: #{rnn_autoencoder_forward.1} parent=1 // pred_fallthru
      _
    // Predicated region
    $region50: #{rnn_autoencoder_forward.1} parent=1 // pred_check
      _
    $region51: #{rnn_autoencoder_forward.1} parent=1 // pred_check_branch
      %50 = sbr.rel (0) target = $region53
    $region52: #{rnn_autoencoder_forward.1} parent=1 // pred_region
      _
    $region53: #{rnn_autoencoder_forward.1} parent=1 // pred_fallthru
      _
    // Predicated region
    $region54: #{rnn_autoencoder_forward.1} parent=1 // pred_check
      _
    $region55: #{rnn_autoencoder_forward.1} parent=1 // pred_check_branch
      %52 = sbr.rel (0) target = $region57
    $region56: #{rnn_autoencoder_forward.1} parent=1 // pred_region
      _
    $region57: #{rnn_autoencoder_forward.1} parent=1 // pred_fallthru
      _
    %v54 = vld [vmem:[%s0] sm:$0xff]
    %v55 = vld [vmem:[%s0 + $0x8] sm:$0xff]
    %v56 = vld [vmem:[%s0 + $0x10] sm:$0xff]
    %v57 = vld [vmem:[%s0 + $0x18] sm:$0xff]
    %v58 = vld [vmem:[%s0 + $0x20] sm:$0xff]
    %v59 = vld [vmem:[%s0 + $0x28] sm:$0xff]
    %v60 = vld [vmem:[%s0 + $0x30] sm:$0xff]
    %v61 = vld [vmem:[%s0 + $0x38] sm:$0xff]
    %v62 = vpack.c.bf16 %v55, %v54
    %v63 = vpack.c.bf16 %v57, %v56
    %v64 = vpack.c.bf16 %v59, %v58
    %v65 = vpack.c.bf16 %v61, %v60
    %v66 = vld [vmem:[%s3] sm:$0xf]
    %v67 = vld [vmem:[%s3 + $0x4] sm:$0xf]
    %v68 = vld [vmem:[%s5] sm:$0x1]
    %v70 = vlaneseq
    %v71 = vshrl.u32 %v70, 7
    %v72 = vsub.s32 0, %v71
    %v73 = vrot.slane %v68, %v72
    %v77 = vunpack.c.l.b16 %v66
    %v78 = vunpack.c.l.b16 %v67
    %v79 = vpack.c.b16 %v78, %v77
    %vm81 = vcmask 130048
    %v83 = vsel %vm81, %v62, 0
    %v86 = vsel %vm81, %v63, 0
    %v89 = vsel %vm81, %v64, 0
    %v92 = vsel %vm81, %v65, 0
    %94 = vmatprep.subr.bf16.mxu0 0
    %95 = vmatpush1.bf16.msra.mxu0 %v79
    %96 = vmatprep.subr.bf16.mxu0 0
    %97 = vmatpush1.bf16.msra.mxu0 0
    %98 = vmatprep.subr.bf16.mxu0 0
    %99 = vmatpush1.bf16.msra.mxu0 0
    %100 = vmatprep.subr.bf16.mxu0 0
    %101 = vmatpush1.bf16.msra.mxu0 0
    %102 = vmatprep.subr.bf16.mxu0 0
    %103 = vmatpush1.bf16.msra.mxu0 0
    %104 = vmatprep.subr.bf16.mxu0 0
    %105 = vmatpush1.bf16.msra.mxu0 0
    %106 = vmatprep.subr.bf16.mxu0 0
    %107 = vmatpush1.bf16.msra.mxu0 0
    %108 = vmatprep.subr.bf16.mxu0 0
    %109 = vmatpush1.bf16.msra.mxu0 0
    %110 = vmatprep.subr.bf16.mxu0 0
    %111 = vmatpush1.bf16.msra.mxu0 0
    %112 = vmatprep.subr.bf16.mxu0 0
    %113 = vmatpush1.bf16.msra.mxu0 0
    %114 = vmatprep.subr.bf16.mxu0 0
    %115 = vmatpush1.bf16.msra.mxu0 0
    %116 = vmatprep.subr.bf16.mxu0 0
    %117 = vmatpush1.bf16.msra.mxu0 0
    %118 = vmatprep.subr.bf16.mxu0 0
    %119 = vmatpush1.bf16.msra.mxu0 0
    %120 = vmatprep.subr.bf16.mxu0 0
    %121 = vmatpush1.bf16.msra.mxu0 0
    %122 = vmatprep.subr.bf16.mxu0 0
    %123 = vmatpush1.bf16.msra.mxu0 0
    %124 = vmatprep.subr.bf16.mxu0 0
    %125 = vmatpush1.bf16.msra.mxu0 0
    %126 = vmatprep.mubr.bf16.mxu0 0
    %127 = vmatmul.mubr.bf16.gmra.mrb[0].mxu0 %v83
    %v128 = vpop.f32.mrb[0].mxu0
    %v129 = vadd.f32 %v73, %v128
    %v130 = vpop.f32.mrb[0].mxu0
    %v131 = vpop.f32.mrb[0].mxu0
    %v132 = vadd.f32 %v73, %v131
    %v133 = vpop.f32.mrb[0].mxu0
    %134 = vmatprep.mubr.bf16.mxu0 0
    %135 = vmatmul.mubr.bf16.gmra.mrb[0].mxu0 %v86
    %v136 = vpop.f32.mrb[0].mxu0
    %v137 = vadd.f32 %v73, %v136
    %v138 = vpop.f32.mrb[0].mxu0
    %v139 = vpop.f32.mrb[0].mxu0
    %v140 = vadd.f32 %v73, %v139
    %v141 = vpop.f32.mrb[0].mxu0
    %142 = vmatprep.mubr.bf16.mxu0 0
    %143 = vmatmul.mubr.bf16.gmra.mrb[0].mxu0 %v89
    %v144 = vpop.f32.mrb[0].mxu0
    %v145 = vadd.f32 %v73, %v144
    %v146 = vpop.f32.mrb[0].mxu0
    %v147 = vpop.f32.mrb[0].mxu0
    %v148 = vadd.f32 %v73, %v147
    %v149 = vpop.f32.mrb[0].mxu0
    %150 = vmatprep.mubr.bf16.mxu0 0
    %151 = vmatmul.mubr.bf16.gmra.mrb[0].mxu0 %v92
    %v152 = vpop.f32.mrb[0].mxu0
    %v153 = vadd.f32 %v73, %v152
    %v154 = vpop.f32.mrb[0].mxu0
    %v155 = vpop.f32.mrb[0].mxu0
    %v156 = vadd.f32 %v73, %v155
    %v157 = vpop.f32.mrb[0].mxu0
    %158 = vdwg.mxu0
    %159 = vst [vmem:[#allocation2] sm:$0xff] %v129
    %160 = vst [vmem:[#allocation2 + $0x8] sm:$0xff] %v132
    %161 = vst [vmem:[#allocation2 + $0x10] sm:$0xff] %v137
    %162 = vst [vmem:[#allocation2 + $0x18] sm:$0xff] %v140
    %163 = vst [vmem:[#allocation2 + $0x20] sm:$0xff] %v145
    %164 = vst [vmem:[#allocation2 + $0x28] sm:$0xff] %v148
    %165 = vst [vmem:[#allocation2 + $0x30] sm:$0xff] %v153
    %166 = vst [vmem:[#allocation2 + $0x38] sm:$0xff] %v156
    %v167 = vld [vmem:[%s4] sm:$0xf]
    %v168 = vld [vmem:[%s4 + $0x4] sm:$0xf]
    %v169 = vld [vmem:[%s4 + $0x8] sm:$0xf]
    %v170 = vld [vmem:[%s4 + $0xc] sm:$0xf]
    %v171 = vld [vmem:[%s1] sm:$0xff]
    %v172 = vld [vmem:[%s2] sm:$0xff]
    %v173 = vld [vmem:[#allocation2] sm:$0xff]
    %v174 = vpack.c.bf16 %v171, %v171
    %v179 = vunpack.c.l.b16 %v167
    %v180 = vunpack.c.l.b16 %v168
    %v181 = vunpack.c.l.b16 %v169
    %v182 = vunpack.c.l.b16 %v170
    %v183 = vpack.c.b16 %v180, %v179
    %v184 = vpack.c.b16 %v182, %v181
    %vm187 = vcmask 261120
    %v189 = vsel %vm187, %v174, 0
    %191 = vmatprep.subr.bf16.mxu0 0
    %192 = vmatpush1.bf16.msra.mxu0 %v183
    %193 = vmatprep.subr.bf16.mxu0 0
    %194 = vmatpush1.bf16.msra.mxu0 %v184
    %195 = vmatprep.subr.bf16.mxu0 0
    %196 = vmatpush1.bf16.msra.mxu0 0
    %197 = vmatprep.subr.bf16.mxu0 0
    %198 = vmatpush1.bf16.msra.mxu0 0
    %199 = vmatprep.subr.bf16.mxu0 0
    %200 = vmatpush1.bf16.msra.mxu0 0
    %201 = vmatprep.subr.bf16.mxu0 0
    %202 = vmatpush1.bf16.msra.mxu0 0
    %203 = vmatprep.subr.bf16.mxu0 0
    %204 = vmatpush1.bf16.msra.mxu0 0
    %205 = vmatprep.subr.bf16.mxu0 0
    %206 = vmatpush1.bf16.msra.mxu0 0
    %207 = vmatprep.subr.bf16.mxu0 0
    %208 = vmatpush1.bf16.msra.mxu0 0
    %209 = vmatprep.subr.bf16.mxu0 0
    %210 = vmatpush1.bf16.msra.mxu0 0
    %211 = vmatprep.subr.bf16.mxu0 0
    %212 = vmatpush1.bf16.msra.mxu0 0
    %213 = vmatprep.subr.bf16.mxu0 0
    %214 = vmatpush1.bf16.msra.mxu0 0
    %215 = vmatprep.subr.bf16.mxu0 0
    %216 = vmatpush1.bf16.msra.mxu0 0
    %217 = vmatprep.subr.bf16.mxu0 0
    %218 = vmatpush1.bf16.msra.mxu0 0
    %219 = vmatprep.subr.bf16.mxu0 0
    %220 = vmatpush1.bf16.msra.mxu0 0
    %221 = vmatprep.subr.bf16.mxu0 0
    %222 = vmatpush1.bf16.msra.mxu0 0
    %223 = vmatprep.mubr.bf16.mxu0 0
    %224 = vmatmul.mubr.bf16.gmra.mrb[0].mxu0 %v189
    %v225 = vpop.f32.mrb[0].mxu0
    %v226 = vadd.f32 0.0, %v225
    %v227 = vpop.f32.mrb[0].mxu0
    %v228 = vpop.f32.mrb[0].mxu0
    %v229 = vpop.f32.mrb[0].mxu0
    %230 = vdwg.mxu0
    %v231 = vadd.f32 %v173, %v226
    %v232 = vxor.u32 %v231, 2147483648
    %v233 = vmul.f32 %v232, 1.442695
    %v234 = vpow.pop %v233
    %v235 = vadd.f32 %v234, 1.0
    %v236 = vrcp.pop %v235
    %v237 = vmul.f32 1.0, %v236
    %v238 = vtanh.pop %v231
    %240 = vrot.lane.b32.xlu0 %v172, 32
    %v241 = vpop.permute.xlu0 %240
    %v243 = vmul.f32 %v237, %v241
    %245 = vrot.lane.b32.xlu0 %v238, 32
    %v246 = vpop.permute.xlu0 %245
    %v248 = vmul.f32 %v237, %v246
    %250 = vrot.lane.b32.xlu0 %v248, 32
    %v251 = vpop.permute.xlu0 %250
    %v253 = vadd.f32 %v243, %v251
    %v254 = vtanh.pop %v253
    %256 = vrot.lane.b32.xlu0 %v254, 32
    %v257 = vpop.permute.xlu0 %256
    %v259 = vmul.f32 %v237, %v257
    %261 = vrot.lane.b32.xlu0 %v259, 64
    %v262 = vpop.permute.xlu0 %261
    %264 = vst.msk [vmem:[#allocation3] sm:$0xff] %vm187, %v262
    %s265 = scalar_lea.vmem [#allocation2], 8
    %v266 = vld [vmem:[%s265] sm:$0xff]
    %v267 = vpack.c.bf16 %v259, %v259
    %269 = vrot.lane.b32.xlu0 %v267, 64
    %v270 = vpop.permute.xlu0 %269
    %v272 = vsel %vm187, %v270, 0
    %274 = vmatprep.subr.bf16.mxu0 0
    %275 = vmatpush1.bf16.msra.mxu0 %v183
    %276 = vmatprep.subr.bf16.mxu0 0
    %277 = vmatpush1.bf16.msra.mxu0 %v184
    %278 = vmatprep.subr.bf16.mxu0 0
    %279 = vmatpush1.bf16.msra.mxu0 0
    %280 = vmatprep.subr.bf16.mxu0 0
    %281 = vmatpush1.bf16.msra.mxu0 0
    %282 = vmatprep.subr.bf16.mxu0 0
    %283 = vmatpush1.bf16.msra.mxu0 0
    %284 = vmatprep.subr.bf16.mxu0 0
    %285 = vmatpush1.bf16.msra.mxu0 0
    %286 = vmatprep.subr.bf16.mxu0 0
    %287 = vmatpush1.bf16.msra.mxu0 0
    %288 = vmatprep.subr.bf16.mxu0 0
    %289 = vmatpush1.bf16.msra.mxu0 0
    %290 = vmatprep.subr.bf16.mxu0 0
    %291 = vmatpush1.bf16.msra.mxu0 0
    %292 = vmatprep.subr.bf16.mxu0 0
    %293 = vmatpush1.bf16.msra.mxu0 0
    %294 = vmatprep.subr.bf16.mxu0 0
    %295 = vmatpush1.bf16.msra.mxu0 0
    %296 = vmatprep.subr.bf16.mxu0 0
    %297 = vmatpush1.bf16.msra.mxu0 0
    %298 = vmatprep.subr.bf16.mxu0 0
    %299 = vmatpush1.bf16.msra.mxu0 0
    %300 = vmatprep.subr.bf16.mxu0 0
    %301 = vmatpush1.bf16.msra.mxu0 0
    %302 = vmatprep.subr.bf16.mxu0 0
    %303 = vmatpush1.bf16.msra.mxu0 0
    %304 = vmatprep.subr.bf16.mxu0 0
    %305 = vmatpush1.bf16.msra.mxu0 0
    %306 = vmatprep.mubr.bf16.mxu0 0
    %307 = vmatmul.mubr.bf16.gmra.mrb[0].mxu0 %v272
    %v308 = vpop.f32.mrb[0].mxu0
    %v309 = vadd.f32 0.0, %v308
    %v310 = vpop.f32.mrb[0].mxu0
    %v311 = vpop.f32.mrb[0].mxu0
    %v312 = vpop.f32.mrb[0].mxu0
    %313 = vdwg.mxu0
    %v314 = vadd.f32 %v266, %v309
    %v315 = vxor.u32 %v314, 2147483648
    %v316 = vmul.f32 %v315, 1.442695
    %v317 = vpow.pop %v316
    %v318 = vadd.f32 %v317, 1.0
    %v319 = vrcp.pop %v318
    %v320 = vmul.f32 1.0, %v319
    %v321 = vtanh.pop %v314
    %v322 = vmul.f32 %v320, %v253
    %324 = vrot.lane.b32.xlu0 %v321, 32
    %v325 = vpop.permute.xlu0 %324
    %v327 = vmul.f32 %v320, %v325
    %329 = vrot.lane.b32.xlu0 %v327, 32
    %v330 = vpop.permute.xlu0 %329
    %v332 = vadd.f32 %v322, %v330
    %v333 = vtanh.pop %v332
    %335 = vrot.lane.b32.xlu0 %v333, 32
    %v336 = vpop.permute.xlu0 %335
    %v338 = vmul.f32 %v320, %v336
    %340 = vrot.lane.b32.xlu0 %v338, 64
    %v341 = vpop.permute.xlu0 %340
    %s343 = scalar_lea.vmem [#allocation3], 8
    %344 = vst.msk [vmem:[%s343] sm:$0xff] %vm187, %v341
    %s345 = scalar_lea.vmem [#allocation2], 16
    %v346 = vld [vmem:[%s345] sm:$0xff]
    %v347 = vpack.c.bf16 %v338, %v338
    %349 = vrot.lane.b32.xlu0 %v347, 64
    %v350 = vpop.permute.xlu0 %349
    %v352 = vsel %vm187, %v350, 0
    %354 = vmatprep.subr.bf16.mxu0 0
    %355 = vmatpush1.bf16.msra.mxu0 %v183
    %356 = vmatprep.subr.bf16.mxu0 0
    %357 = vmatpush1.bf16.msra.mxu0 %v184
    %358 = vmatprep.subr.bf16.mxu0 0
    %359 = vmatpush1.bf16.msra.mxu0 0
    %360 = vmatprep.subr.bf16.mxu0 0
    %361 = vmatpush1.bf16.msra.mxu0 0
    %362 = vmatprep.subr.bf16.mxu0 0
    %363 = vmatpush1.bf16.msra.mxu0 0
    %364 = vmatprep.subr.bf16.mxu0 0
    %365 = vmatpush1.bf16.msra.mxu0 0
    %366 = vmatprep.subr.bf16.mxu0 0
    %367 = vmatpush1.bf16.msra.mxu0 0
    %368 = vmatprep.subr.bf16.mxu0 0
    %369 = vmatpush1.bf16.msra.mxu0 0
    %370 = vmatprep.subr.bf16.mxu0 0
    %371 = vmatpush1.bf16.msra.mxu0 0
    %372 = vmatprep.subr.bf16.mxu0 0
    %373 = vmatpush1.bf16.msra.mxu0 0
    %374 = vmatprep.subr.bf16.mxu0 0
    %375 = vmatpush1.bf16.msra.mxu0 0
    %376 = vmatprep.subr.bf16.mxu0 0
    %377 = vmatpush1.bf16.msra.mxu0 0
    %378 = vmatprep.subr.bf16.mxu0 0
    %379 = vmatpush1.bf16.msra.mxu0 0
    %380 = vmatprep.subr.bf16.mxu0 0
    %381 = vmatpush1.bf16.msra.mxu0 0
    %382 = vmatprep.subr.bf16.mxu0 0
    %383 = vmatpush1.bf16.msra.mxu0 0
    %384 = vmatprep.subr.bf16.mxu0 0
    %385 = vmatpush1.bf16.msra.mxu0 0
    %386 = vmatprep.mubr.bf16.mxu0 0
    %387 = vmatmul.mubr.bf16.gmra.mrb[0].mxu0 %v352
    %v388 = vpop.f32.mrb[0].mxu0
    %v389 = vadd.f32 0.0, %v388
    %v390 = vpop.f32.mrb[0].mxu0
    %v391 = vpop.f32.mrb[0].mxu0
    %v392 = vpop.f32.mrb[0].mxu0
    %393 = vdwg.mxu0
    %v394 = vadd.f32 %v346, %v389
    %v395 = vxor.u32 %v394, 2147483648
    %v396 = vmul.f32 %v395, 1.442695
    %v397 = vpow.pop %v396
    %v398 = vadd.f32 %v397, 1.0
    %v399 = vrcp.pop %v398
    %v400 = vmul.f32 1.0, %v399
    %v401 = vtanh.pop %v394
    %v402 = vmul.f32 %v400, %v332
    %404 = vrot.lane.b32.xlu0 %v401, 32
    %v405 = vpop.permute.xlu0 %404
    %v407 = vmul.f32 %v400, %v405
    %409 = vrot.lane.b32.xlu0 %v407, 32
    %v410 = vpop.permute.xlu0 %409
    %v412 = vadd.f32 %v402, %v410
    %v413 = vtanh.pop %v412
    %415 = vrot.lane.b32.xlu0 %v413, 32
    %v416 = vpop.permute.xlu0 %415
    %v418 = vmul.f32 %v400, %v416
    %420 = vrot.lane.b32.xlu0 %v418, 64
    %v421 = vpop.permute.xlu0 %420
    %s423 = scalar_lea.vmem [#allocation3], 16
    %424 = vst.msk [vmem:[%s423] sm:$0xff] %vm187, %v421
    %s425 = scalar_lea.vmem [#allocation2], 24
    %v426 = vld [vmem:[%s425] sm:$0xff]
    %v427 = vpack.c.bf16 %v418, %v418
    %429 = vrot.lane.b32.xlu0 %v427, 64
    %v430 = vpop.permute.xlu0 %429
    %v432 = vsel %vm187, %v430, 0
    %434 = vmatprep.subr.bf16.mxu0 0
    %435 = vmatpush1.bf16.msra.mxu0 %v183
    %436 = vmatprep.subr.bf16.mxu0 0
    %437 = vmatpush1.bf16.msra.mxu0 %v184
    %438 = vmatprep.subr.bf16.mxu0 0
    %439 = vmatpush1.bf16.msra.mxu0 0
    %440 = vmatprep.subr.bf16.mxu0 0
    %441 = vmatpush1.bf16.msra.mxu0 0
    %442 = vmatprep.subr.bf16.mxu0 0
    %443 = vmatpush1.bf16.msra.mxu0 0
    %444 = vmatprep.subr.bf16.mxu0 0
    %445 = vmatpush1.bf16.msra.mxu0 0
    %446 = vmatprep.subr.bf16.mxu0 0
    %447 = vmatpush1.bf16.msra.mxu0 0
    %448 = vmatprep.subr.bf16.mxu0 0
    %449 = vmatpush1.bf16.msra.mxu0 0
    %450 = vmatprep.subr.bf16.mxu0 0
    %451 = vmatpush1.bf16.msra.mxu0 0
    %452 = vmatprep.subr.bf16.mxu0 0
    %453 = vmatpush1.bf16.msra.mxu0 0
    %454 = vmatprep.subr.bf16.mxu0 0
    %455 = vmatpush1.bf16.msra.mxu0 0
    %456 = vmatprep.subr.bf16.mxu0 0
    %457 = vmatpush1.bf16.msra.mxu0 0
    %458 = vmatprep.subr.bf16.mxu0 0
    %459 = vmatpush1.bf16.msra.mxu0 0
    %460 = vmatprep.subr.bf16.mxu0 0
    %461 = vmatpush1.bf16.msra.mxu0 0
    %462 = vmatprep.subr.bf16.mxu0 0
    %463 = vmatpush1.bf16.msra.mxu0 0
    %464 = vmatprep.subr.bf16.mxu0 0
    %465 = vmatpush1.bf16.msra.mxu0 0
    %466 = vmatprep.mubr.bf16.mxu0 0
    %467 = vmatmul.mubr.bf16.gmra.mrb[0].mxu0 %v432
    %v468 = vpop.f32.mrb[0].mxu0
    %v469 = vadd.f32 0.0, %v468
    %v470 = vpop.f32.mrb[0].mxu0
    %v471 = vpop.f32.mrb[0].mxu0
    %v472 = vpop.f32.mrb[0].mxu0
    %473 = vdwg.mxu0
    %v474 = vadd.f32 %v426, %v469
    %v475 = vxor.u32 %v474, 2147483648
    %v476 = vmul.f32 %v475, 1.442695
    %v477 = vpow.pop %v476
    %v478 = vadd.f32 %v477, 1.0
    %v479 = vrcp.pop %v478
    %v480 = vmul.f32 1.0, %v479
    %v481 = vtanh.pop %v474
    %v482 = vmul.f32 %v480, %v412
    %484 = vrot.lane.b32.xlu0 %v481, 32
    %v485 = vpop.permute.xlu0 %484
    %v487 = vmul.f32 %v480, %v485
    %489 = vrot.lane.b32.xlu0 %v487, 32
    %v490 = vpop.permute.xlu0 %489
    %v492 = vadd.f32 %v482, %v490
    %v493 = vtanh.pop %v492
    %495 = vrot.lane.b32.xlu0 %v493, 32
    %v496 = vpop.permute.xlu0 %495
    %v498 = vmul.f32 %v480, %v496
    %500 = vrot.lane.b32.xlu0 %v498, 64
    %v501 = vpop.permute.xlu0 %500
    %s503 = scalar_lea.vmem [#allocation3], 24
    %504 = vst.msk [vmem:[%s503] sm:$0xff] %vm187, %v501
    %s505 = scalar_lea.vmem [#allocation2], 32
    %v506 = vld [vmem:[%s505] sm:$0xff]
    %v507 = vpack.c.bf16 %v498, %v498
    %509 = vrot.lane.b32.xlu0 %v507, 64
    %v510 = vpop.permute.xlu0 %509
    %v512 = vsel %vm187, %v510, 0
    %514 = vmatprep.subr.bf16.mxu0 0
    %515 = vmatpush1.bf16.msra.mxu0 %v183
    %516 = vmatprep.subr.bf16.mxu0 0
    %517 = vmatpush1.bf16.msra.mxu0 %v184
    %518 = vmatprep.subr.bf16.mxu0 0
    %519 = vmatpush1.bf16.msra.mxu0 0
    %520 = vmatprep.subr.bf16.mxu0 0
    %521 = vmatpush1.bf16.msra.mxu0 0
    %522 = vmatprep.subr.bf16.mxu0 0
    %523 = vmatpush1.bf16.msra.mxu0 0
    %524 = vmatprep.subr.bf16.mxu0 0
    %525 = vmatpush1.bf16.msra.mxu0 0
    %526 = vmatprep.subr.bf16.mxu0 0
    %527 = vmatpush1.bf16.msra.mxu0 0
    %528 = vmatprep.subr.bf16.mxu0 0
    %529 = vmatpush1.bf16.msra.mxu0 0
    %530 = vmatprep.subr.bf16.mxu0 0
    %531 = vmatpush1.bf16.msra.mxu0 0
    %532 = vmatprep.subr.bf16.mxu0 0
    %533 = vmatpush1.bf16.msra.mxu0 0
    %534 = vmatprep.subr.bf16.mxu0 0
    %535 = vmatpush1.bf16.msra.mxu0 0
    %536 = vmatprep.subr.bf16.mxu0 0
    %537 = vmatpush1.bf16.msra.mxu0 0
    %538 = vmatprep.subr.bf16.mxu0 0
    %539 = vmatpush1.bf16.msra.mxu0 0
    %540 = vmatprep.subr.bf16.mxu0 0
    %541 = vmatpush1.bf16.msra.mxu0 0
    %542 = vmatprep.subr.bf16.mxu0 0
    %543 = vmatpush1.bf16.msra.mxu0 0
    %544 = vmatprep.subr.bf16.mxu0 0
    %545 = vmatpush1.bf16.msra.mxu0 0
    %546 = vmatprep.mubr.bf16.mxu0 0
    %547 = vmatmul.mubr.bf16.gmra.mrb[0].mxu0 %v512
    %v548 = vpop.f32.mrb[0].mxu0
    %v549 = vadd.f32 0.0, %v548
    %v550 = vpop.f32.mrb[0].mxu0
    %v551 = vpop.f32.mrb[0].mxu0
    %v552 = vpop.f32.mrb[0].mxu0
    %553 = vdwg.mxu0
    %v554 = vadd.f32 %v506, %v549
    %v555 = vxor.u32 %v554, 2147483648
    %v556 = vmul.f32 %v555, 1.442695
    %v557 = vpow.pop %v556
    %v558 = vadd.f32 %v557, 1.0
    %v559 = vrcp.pop %v558
    %v560 = vmul.f32 1.0, %v559
    %v561 = vtanh.pop %v554
    %v562 = vmul.f32 %v560, %v492
    %564 = vrot.lane.b32.xlu0 %v561, 32
    %v565 = vpop.permute.xlu0 %564
    %v567 = vmul.f32 %v560, %v565
    %569 = vrot.lane.b32.xlu0 %v567, 32
    %v570 = vpop.permute.xlu0 %569
    %v572 = vadd.f32 %v562, %v570
    %v573 = vtanh.pop %v572
    %575 = vrot.lane.b32.xlu0 %v573, 32
    %v576 = vpop.permute.xlu0 %575
    %v578 = vmul.f32 %v560, %v576
    %580 = vrot.lane.b32.xlu0 %v578, 64
    %v581 = vpop.permute.xlu0 %580
    %s583 = scalar_lea.vmem [#allocation3], 32
    %584 = vst.msk [vmem:[%s583] sm:$0xff] %vm187, %v581
    %s585 = scalar_lea.vmem [#allocation2], 40
    %v586 = vld [vmem:[%s585] sm:$0xff]
    %v587 = vpack.c.bf16 %v578, %v578
    %589 = vrot.lane.b32.xlu0 %v587, 64
    %v590 = vpop.permute.xlu0 %589
    %v592 = vsel %vm187, %v590, 0
    %594 = vmatprep.subr.bf16.mxu0 0
    %595 = vmatpush1.bf16.msra.mxu0 %v183
    %596 = vmatprep.subr.bf16.mxu0 0
    %597 = vmatpush1.bf16.msra.mxu0 %v184
    %598 = vmatprep.subr.bf16.mxu0 0
    %599 = vmatpush1.bf16.msra.mxu0 0
    %600 = vmatprep.subr.bf16.mxu0 0
    %601 = vmatpush1.bf16.msra.mxu0 0
    %602 = vmatprep.subr.bf16.mxu0 0
    %603 = vmatpush1.bf16.msra.mxu0 0
    %604 = vmatprep.subr.bf16.mxu0 0
    %605 = vmatpush1.bf16.msra.mxu0 0
    %606 = vmatprep.subr.bf16.mxu0 0
    %607 = vmatpush1.bf16.msra.mxu0 0
    %608 = vmatprep.subr.bf16.mxu0 0
    %609 = vmatpush1.bf16.msra.mxu0 0
    %610 = vmatprep.subr.bf16.mxu0 0
    %611 = vmatpush1.bf16.msra.mxu0 0
    %612 = vmatprep.subr.bf16.mxu0 0
    %613 = vmatpush1.bf16.msra.mxu0 0
    %614 = vmatprep.subr.bf16.mxu0 0
    %615 = vmatpush1.bf16.msra.mxu0 0
    %616 = vmatprep.subr.bf16.mxu0 0
    %617 = vmatpush1.bf16.msra.mxu0 0
    %618 = vmatprep.subr.bf16.mxu0 0
    %619 = vmatpush1.bf16.msra.mxu0 0
    %620 = vmatprep.subr.bf16.mxu0 0
    %621 = vmatpush1.bf16.msra.mxu0 0
    %622 = vmatprep.subr.bf16.mxu0 0
    %623 = vmatpush1.bf16.msra.mxu0 0
    %624 = vmatprep.subr.bf16.mxu0 0
    %625 = vmatpush1.bf16.msra.mxu0 0
    %626 = vmatprep.mubr.bf16.mxu0 0
    %627 = vmatmul.mubr.bf16.gmra.mrb[0].mxu0 %v592
    %v628 = vpop.f32.mrb[0].mxu0
    %v629 = vadd.f32 0.0, %v628
    %v630 = vpop.f32.mrb[0].mxu0
    %v631 = vpop.f32.mrb[0].mxu0
    %v632 = vpop.f32.mrb[0].mxu0
    %633 = vdwg.mxu0
    %v634 = vadd.f32 %v586, %v629
    %v635 = vxor.u32 %v634, 2147483648
    %v636 = vmul.f32 %v635, 1.442695
    %v637 = vpow.pop %v636
    %v638 = vadd.f32 %v637, 1.0
    %v639 = vrcp.pop %v638
    %v640 = vmul.f32 1.0, %v639
    %v641 = vtanh.pop %v634
    %v642 = vmul.f32 %v640, %v572
    %644 = vrot.lane.b32.xlu0 %v641, 32
    %v645 = vpop.permute.xlu0 %644
    %v647 = vmul.f32 %v640, %v645
    %649 = vrot.lane.b32.xlu0 %v647, 32
    %v650 = vpop.permute.xlu0 %649
    %v652 = vadd.f32 %v642, %v650
    %v653 = vtanh.pop %v652
    %655 = vrot.lane.b32.xlu0 %v653, 32
    %v656 = vpop.permute.xlu0 %655
    %v658 = vmul.f32 %v640, %v656
    %660 = vrot.lane.b32.xlu0 %v658, 64
    %v661 = vpop.permute.xlu0 %660
    %s663 = scalar_lea.vmem [#allocation3], 40
    %664 = vst.msk [vmem:[%s663] sm:$0xff] %vm187, %v661
    %s665 = scalar_lea.vmem [#allocation2], 48
    %v666 = vld [vmem:[%s665] sm:$0xff]
    %v667 = vpack.c.bf16 %v658, %v658
    %669 = vrot.lane.b32.xlu0 %v667, 64
    %v670 = vpop.permute.xlu0 %669
    %v672 = vsel %vm187, %v670, 0
    %674 = vmatprep.subr.bf16.mxu0 0
    %675 = vmatpush1.bf16.msra.mxu0 %v183
    %676 = vmatprep.subr.bf16.mxu0 0
    %677 = vmatpush1.bf16.msra.mxu0 %v184
    %678 = vmatprep.subr.bf16.mxu0 0
    %679 = vmatpush1.bf16.msra.mxu0 0
    %680 = vmatprep.subr.bf16.mxu0 0
    %681 = vmatpush1.bf16.msra.mxu0 0
    %682 = vmatprep.subr.bf16.mxu0 0
    %683 = vmatpush1.bf16.msra.mxu0 0
    %684 = vmatprep.subr.bf16.mxu0 0
    %685 = vmatpush1.bf16.msra.mxu0 0
    %686 = vmatprep.subr.bf16.mxu0 0
    %687 = vmatpush1.bf16.msra.mxu0 0
    %688 = vmatprep.subr.bf16.mxu0 0
    %689 = vmatpush1.bf16.msra.mxu0 0
    %690 = vmatprep.subr.bf16.mxu0 0
    %691 = vmatpush1.bf16.msra.mxu0 0
    %692 = vmatprep.subr.bf16.mxu0 0
    %693 = vmatpush1.bf16.msra.mxu0 0
    %694 = vmatprep.subr.bf16.mxu0 0
    %695 = vmatpush1.bf16.msra.mxu0 0
    %696 = vmatprep.subr.bf16.mxu0 0
    %697 = vmatpush1.bf16.msra.mxu0 0
    %698 = vmatprep.subr.bf16.mxu0 0
    %699 = vmatpush1.bf16.msra.mxu0 0
    %700 = vmatprep.subr.bf16.mxu0 0
    %701 = vmatpush1.bf16.msra.mxu0 0
    %702 = vmatprep.subr.bf16.mxu0 0
    %703 = vmatpush1.bf16.msra.mxu0 0
    %704 = vmatprep.subr.bf16.mxu0 0
    %705 = vmatpush1.bf16.msra.mxu0 0
    %706 = vmatprep.mubr.bf16.mxu0 0
    %707 = vmatmul.mubr.bf16.gmra.mrb[0].mxu0 %v672
    %v708 = vpop.f32.mrb[0].mxu0
    %v709 = vadd.f32 0.0, %v708
    %v710 = vpop.f32.mrb[0].mxu0
    %v711 = vpop.f32.mrb[0].mxu0
    %v712 = vpop.f32.mrb[0].mxu0
    %713 = vdwg.mxu0
    %v714 = vadd.f32 %v666, %v709
    %v715 = vxor.u32 %v714, 2147483648
    %v716 = vmul.f32 %v715, 1.442695
    %v717 = vpow.pop %v716
    %v718 = vadd.f32 %v717, 1.0
    %v719 = vrcp.pop %v718
    %v720 = vmul.f32 1.0, %v719
    %v721 = vtanh.pop %v714
    %v722 = vmul.f32 %v720, %v652
    %724 = vrot.lane.b32.xlu0 %v721, 32
    %v725 = vpop.permute.xlu0 %724
    %v727 = vmul.f32 %v720, %v725
    %729 = vrot.lane.b32.xlu0 %v727, 32
    %v730 = vpop.permute.xlu0 %729
    %v732 = vadd.f32 %v722, %v730
    %v733 = vtanh.pop %v732
    %735 = vrot.lane.b32.xlu0 %v733, 32
    %v736 = vpop.permute.xlu0 %735
    %v738 = vmul.f32 %v720, %v736
    %740 = vrot.lane.b32.xlu0 %v738, 64
    %v741 = vpop.permute.xlu0 %740
    %s743 = scalar_lea.vmem [#allocation3], 48
    %744 = vst.msk [vmem:[%s743] sm:$0xff] %vm187, %v741
    %s745 = scalar_lea.vmem [#allocation2], 56
    %v746 = vld [vmem:[%s745] sm:$0xff]
    %v747 = vpack.c.bf16 %v738, %v738
    %749 = vrot.lane.b32.xlu0 %v747, 64
    %v750 = vpop.permute.xlu0 %749
    %v752 = vsel %vm187, %v750, 0
    %754 = vmatprep.subr.bf16.mxu0 0
    %755 = vmatpush1.bf16.msra.mxu0 %v183
    %756 = vmatprep.subr.bf16.mxu0 0
    %757 = vmatpush1.bf16.msra.mxu0 %v184
    %758 = vmatprep.subr.bf16.mxu0 0
    %759 = vmatpush1.bf16.msra.mxu0 0
    %760 = vmatprep.subr.bf16.mxu0 0
    %761 = vmatpush1.bf16.msra.mxu0 0
    %762 = vmatprep.subr.bf16.mxu0 0
    %763 = vmatpush1.bf16.msra.mxu0 0
    %764 = vmatprep.subr.bf16.mxu0 0
    %765 = vmatpush1.bf16.msra.mxu0 0
    %766 = vmatprep.subr.bf16.mxu0 0
    %767 = vmatpush1.bf16.msra.mxu0 0
    %768 = vmatprep.subr.bf16.mxu0 0
    %769 = vmatpush1.bf16.msra.mxu0 0
    %770 = vmatprep.subr.bf16.mxu0 0
    %771 = vmatpush1.bf16.msra.mxu0 0
    %772 = vmatprep.subr.bf16.mxu0 0
    %773 = vmatpush1.bf16.msra.mxu0 0
    %774 = vmatprep.subr.bf16.mxu0 0
    %775 = vmatpush1.bf16.msra.mxu0 0
    %776 = vmatprep.subr.bf16.mxu0 0
    %777 = vmatpush1.bf16.msra.mxu0 0
    %778 = vmatprep.subr.bf16.mxu0 0
    %779 = vmatpush1.bf16.msra.mxu0 0
    %780 = vmatprep.subr.bf16.mxu0 0
    %781 = vmatpush1.bf16.msra.mxu0 0
    %782 = vmatprep.subr.bf16.mxu0 0
    %783 = vmatpush1.bf16.msra.mxu0 0
    %784 = vmatprep.subr.bf16.mxu0 0
    %785 = vmatpush1.bf16.msra.mxu0 0
    %786 = vmatprep.mubr.bf16.mxu0 0
    %787 = vmatmul.mubr.bf16.gmra.mrb[0].mxu0 %v752
    %v788 = vpop.f32.mrb[0].mxu0
    %v789 = vadd.f32 0.0, %v788
    %v790 = vpop.f32.mrb[0].mxu0
    %v791 = vpop.f32.mrb[0].mxu0
    %v792 = vpop.f32.mrb[0].mxu0
    %793 = vdwg.mxu0
    %v794 = vadd.f32 %v746, %v789
    %v795 = vxor.u32 %v794, 2147483648
    %v796 = vmul.f32 %v795, 1.442695
    %v797 = vpow.pop %v796
    %v798 = vadd.f32 %v797, 1.0
    %v799 = vrcp.pop %v798
    %v800 = vmul.f32 1.0, %v799
    %v801 = vtanh.pop %v794
    %v802 = vmul.f32 %v800, %v732
    %804 = vrot.lane.b32.xlu0 %v801, 32
    %v805 = vpop.permute.xlu0 %804
    %v807 = vmul.f32 %v800, %v805
    %809 = vrot.lane.b32.xlu0 %v807, 32
    %v810 = vpop.permute.xlu0 %809
    %v812 = vadd.f32 %v802, %v810
    %v813 = vtanh.pop %v812
    %815 = vrot.lane.b32.xlu0 %v813, 32
    %v816 = vpop.permute.xlu0 %815
    %v818 = vmul.f32 %v800, %v816
    %820 = vrot.lane.b32.xlu0 %v818, 64
    %v821 = vpop.permute.xlu0 %820
    %s823 = scalar_lea.vmem [#allocation3], 56
    %824 = vst.msk [vmem:[%s823] sm:$0xff] %vm187, %v821
    %v825 = vld [vmem:[#allocation3] sm:$0xff]
    %v826 = vld [vmem:[#allocation3 + $0x8] sm:$0xff]
    %v827 = vld [vmem:[#allocation3 + $0x10] sm:$0xff]
    %v828 = vld [vmem:[#allocation3 + $0x18] sm:$0xff]
    %v829 = vld [vmem:[#allocation3 + $0x20] sm:$0xff]
    %v830 = vld [vmem:[#allocation3 + $0x28] sm:$0xff]
    %v831 = vld [vmem:[#allocation3 + $0x30] sm:$0xff]
    %v832 = vld [vmem:[#allocation3 + $0x38] sm:$0xff]
    %v833 = vpack.c.bf16 %v826, %v825
    %v834 = vpack.c.bf16 %v828, %v827
    %v835 = vpack.c.bf16 %v830, %v829
    %v836 = vpack.c.bf16 %v832, %v831
    %v837 = vld [vmem:[%s6] sm:$0xf]
    %v838 = vld [vmem:[%s6 + $0x4] sm:$0xf]
    %v839 = vld [vmem:[%s6 + $0x8] sm:$0xf]
    %v840 = vld [vmem:[%s6 + $0xc] sm:$0xf]
    %v841 = vld [vmem:[%s7] sm:$0x1]
    %v843 = vlaneseq
    %v844 = vshrl.u32 %v843, 7
    %v845 = vsub.s32 0, %v844
    %v846 = vrot.slane %v841, %v845
    %v852 = vunpack.c.l.b16 %v837
    %v853 = vunpack.c.l.b16 %v838
    %v854 = vunpack.c.l.b16 %v839
    %v855 = vunpack.c.l.b16 %v840
    %v856 = vpack.c.b16 %v853, %v852
    %v857 = vpack.c.b16 %v855, %v854
    %v861 = vsel %vm187, %v833, 0
    %v864 = vsel %vm187, %v834, 0
    %v867 = vsel %vm187, %v835, 0
    %v870 = vsel %vm187, %v836, 0
    %872 = vmatprep.subr.bf16.mxu0 0
    %873 = vmatpush1.bf16.msra.mxu0 %v856
    %874 = vmatprep.subr.bf16.mxu0 0
    %875 = vmatpush1.bf16.msra.mxu0 %v857
    %876 = vmatprep.subr.bf16.mxu0 0
    %877 = vmatpush1.bf16.msra.mxu0 0
    %878 = vmatprep.subr.bf16.mxu0 0
    %879 = vmatpush1.bf16.msra.mxu0 0
    %880 = vmatprep.subr.bf16.mxu0 0
    %881 = vmatpush1.bf16.msra.mxu0 0
    %882 = vmatprep.subr.bf16.mxu0 0
    %883 = vmatpush1.bf16.msra.mxu0 0
    %884 = vmatprep.subr.bf16.mxu0 0
    %885 = vmatpush1.bf16.msra.mxu0 0
    %886 = vmatprep.subr.bf16.mxu0 0
    %887 = vmatpush1.bf16.msra.mxu0 0
    %888 = vmatprep.subr.bf16.mxu0 0
    %889 = vmatpush1.bf16.msra.mxu0 0
    %890 = vmatprep.subr.bf16.mxu0 0
    %891 = vmatpush1.bf16.msra.mxu0 0
    %892 = vmatprep.subr.bf16.mxu0 0
    %893 = vmatpush1.bf16.msra.mxu0 0
    %894 = vmatprep.subr.bf16.mxu0 0
    %895 = vmatpush1.bf16.msra.mxu0 0
    %896 = vmatprep.subr.bf16.mxu0 0
    %897 = vmatpush1.bf16.msra.mxu0 0
    %898 = vmatprep.subr.bf16.mxu0 0
    %899 = vmatpush1.bf16.msra.mxu0 0
    %900 = vmatprep.subr.bf16.mxu0 0
    %901 = vmatpush1.bf16.msra.mxu0 0
    %902 = vmatprep.subr.bf16.mxu0 0
    %903 = vmatpush1.bf16.msra.mxu0 0
    %904 = vmatprep.mubr.bf16.mxu0 0
    %905 = vmatmul.mubr.bf16.gmra.mrb[0].mxu0 %v861
    %v906 = vpop.f32.mrb[0].mxu0
    %v907 = vadd.f32 %v846, %v906
    %v908 = vpop.f32.mrb[0].mxu0
    %v909 = vpop.f32.mrb[0].mxu0
    %v910 = vadd.f32 %v846, %v909
    %v911 = vpop.f32.mrb[0].mxu0
    %912 = vmatprep.mubr.bf16.mxu0 0
    %913 = vmatmul.mubr.bf16.gmra.mrb[0].mxu0 %v864
    %v914 = vpop.f32.mrb[0].mxu0
    %v915 = vadd.f32 %v846, %v914
    %v916 = vpop.f32.mrb[0].mxu0
    %v917 = vpop.f32.mrb[0].mxu0
    %v918 = vadd.f32 %v846, %v917
    %v919 = vpop.f32.mrb[0].mxu0
    %920 = vmatprep.mubr.bf16.mxu0 0
    %921 = vmatmul.mubr.bf16.gmra.mrb[0].mxu0 %v867
    %v922 = vpop.f32.mrb[0].mxu0
    %v923 = vadd.f32 %v846, %v922
    %v924 = vpop.f32.mrb[0].mxu0
    %v925 = vpop.f32.mrb[0].mxu0
    %v926 = vadd.f32 %v846, %v925
    %v927 = vpop.f32.mrb[0].mxu0
    %928 = vmatprep.mubr.bf16.mxu0 0
    %929 = vmatmul.mubr.bf16.gmra.mrb[0].mxu0 %v870
    %v930 = vpop.f32.mrb[0].mxu0
    %v931 = vadd.f32 %v846, %v930
    %v932 = vpop.f32.mrb[0].mxu0
    %v933 = vpop.f32.mrb[0].mxu0
    %v934 = vadd.f32 %v846, %v933
    %v935 = vpop.f32.mrb[0].mxu0
    %936 = vdwg.mxu0
    %937 = vst.msk [vmem:[%s15] sm:$0xff] %vm187, %v907
    %938 = vst.msk [vmem:[%s15 + $0x8] sm:$0xff] %vm187, %v910
    %939 = vst.msk [vmem:[%s15 + $0x10] sm:$0xff] %vm187, %v915
    %940 = vst.msk [vmem:[%s15 + $0x18] sm:$0xff] %vm187, %v918
    %941 = vst.msk [vmem:[%s15 + $0x20] sm:$0xff] %vm187, %v923
    %942 = vst.msk [vmem:[%s15 + $0x28] sm:$0xff] %vm187, %v926
    %943 = vst.msk [vmem:[%s15 + $0x30] sm:$0xff] %vm187, %v931
    %944 = vst.msk [vmem:[%s15 + $0x38] sm:$0xff] %vm187, %v934
    %v945 = vld [vmem:[%s8] sm:$0xff]
    %v946 = vld [vmem:[%s8 + $0x8] sm:$0xff]
    %v947 = vld [vmem:[%s8 + $0x10] sm:$0xff]
    %v948 = vld [vmem:[%s8 + $0x18] sm:$0xff]
    %v949 = vld [vmem:[%s8 + $0x20] sm:$0xff]
    %v950 = vld [vmem:[%s8 + $0x28] sm:$0xff]
    %v951 = vld [vmem:[%s8 + $0x30] sm:$0xff]
    %v952 = vld [vmem:[%s8 + $0x38] sm:$0xff]
    %v953 = vmul.f32 %v907, 0.5
    %v954 = vmul.f32 %v910, 0.5
    %v955 = vmul.f32 %v915, 0.5
    %v956 = vmul.f32 %v918, 0.5
    %v957 = vmul.f32 %v923, 0.5
    %v958 = vmul.f32 %v926, 0.5
    %v959 = vmul.f32 %v931, 0.5
    %v960 = vmul.f32 %v934, 0.5
    %v961 = vmul.f32 %v953, 1.442695
    %v962 = vpow.pop %v961
    %v963 = vmul.f32 %v954, 1.442695
    %v964 = vpow.pop %v963
    %v965 = vmul.f32 %v955, 1.442695
    %v966 = vpow.pop %v965
    %v967 = vmul.f32 %v956, 1.442695
    %v968 = vpow.pop %v967
    %v969 = vmul.f32 %v957, 1.442695
    %v970 = vpow.pop %v969
    %v971 = vmul.f32 %v958, 1.442695
    %v972 = vpow.pop %v971
    %v973 = vmul.f32 %v959, 1.442695
    %v974 = vpow.pop %v973
    %v975 = vmul.f32 %v960, 1.442695
    %v976 = vpow.pop %v975
    %985 = vrot.lane.b32.xlu0 %v962, 112
    %v986 = vpop.permute.xlu0 %985
    %987 = vrot.lane.b32.xlu0 %v964, 112
    %v988 = vpop.permute.xlu0 %987
    %989 = vrot.lane.b32.xlu0 %v966, 112
    %v990 = vpop.permute.xlu0 %989
    %991 = vrot.lane.b32.xlu0 %v968, 112
    %v992 = vpop.permute.xlu0 %991
    %993 = vrot.lane.b32.xlu0 %v970, 112
    %v994 = vpop.permute.xlu0 %993
    %995 = vrot.lane.b32.xlu0 %v972, 112
    %v996 = vpop.permute.xlu0 %995
    %997 = vrot.lane.b32.xlu0 %v974, 112
    %v998 = vpop.permute.xlu0 %997
    %999 = vrot.lane.b32.xlu0 %v976, 112
    %v1000 = vpop.permute.xlu0 %999
    %v1009 = vmul.f32 %v945, %v986
    %v1010 = vmul.f32 %v946, %v988
    %v1011 = vmul.f32 %v947, %v990
    %v1012 = vmul.f32 %v948, %v992
    %v1013 = vmul.f32 %v949, %v994
    %v1014 = vmul.f32 %v950, %v996
    %v1015 = vmul.f32 %v951, %v998
    %v1016 = vmul.f32 %v952, %v1000
    %v1017 = vadd.f32 %v907, %v1009
    %v1018 = vadd.f32 %v910, %v1010
    %v1019 = vadd.f32 %v915, %v1011
    %v1020 = vadd.f32 %v918, %v1012
    %v1021 = vadd.f32 %v923, %v1013
    %v1022 = vadd.f32 %v926, %v1014
    %v1023 = vadd.f32 %v931, %v1015
    %v1024 = vadd.f32 %v934, %v1016
    %v1025 = vpack.c.bf16 %v1018, %v1017
    %v1026 = vpack.c.bf16 %v1020, %v1019
    %v1027 = vpack.c.bf16 %v1022, %v1021
    %v1028 = vpack.c.bf16 %v1024, %v1023
    %v1029 = vld [vmem:[%s9] sm:$0xf]
    %v1030 = vld [vmem:[%s9 + $0x4] sm:$0xf]
    %v1031 = vld [vmem:[%s10] sm:$0x1]
    %v1033 = vlaneseq
    %v1034 = vshrl.u32 %v1033, 7
    %v1035 = vsub.s32 0, %v1034
    %v1036 = vrot.slane %v1031, %v1035
    %v1040 = vunpack.c.l.b16 %v1029
    %v1041 = vunpack.c.l.b16 %v1030
    %v1042 = vpack.c.b16 %v1041, %v1040
    %v1045 = vsel %vm81, %v1025, 0
    %v1048 = vsel %vm81, %v1026, 0
    %v1051 = vsel %vm81, %v1027, 0
    %v1054 = vsel %vm81, %v1028, 0
    %1056 = vmatprep.subr.bf16.mxu0 0
    %1057 = vmatpush1.bf16.msra.mxu0 %v1042
    %1058 = vmatprep.subr.bf16.mxu0 0
    %1059 = vmatpush1.bf16.msra.mxu0 0
    %1060 = vmatprep.subr.bf16.mxu0 0
    %1061 = vmatpush1.bf16.msra.mxu0 0
    %1062 = vmatprep.subr.bf16.mxu0 0
    %1063 = vmatpush1.bf16.msra.mxu0 0
    %1064 = vmatprep.subr.bf16.mxu0 0
    %1065 = vmatpush1.bf16.msra.mxu0 0
    %1066 = vmatprep.subr.bf16.mxu0 0
    %1067 = vmatpush1.bf16.msra.mxu0 0
    %1068 = vmatprep.subr.bf16.mxu0 0
    %1069 = vmatpush1.bf16.msra.mxu0 0
    %1070 = vmatprep.subr.bf16.mxu0 0
    %1071 = vmatpush1.bf16.msra.mxu0 0
    %1072 = vmatprep.subr.bf16.mxu0 0
    %1073 = vmatpush1.bf16.msra.mxu0 0
    %1074 = vmatprep.subr.bf16.mxu0 0
    %1075 = vmatpush1.bf16.msra.mxu0 0
    %1076 = vmatprep.subr.bf16.mxu0 0
    %1077 = vmatpush1.bf16.msra.mxu0 0
    %1078 = vmatprep.subr.bf16.mxu0 0
    %1079 = vmatpush1.bf16.msra.mxu0 0
    %1080 = vmatprep.subr.bf16.mxu0 0
    %1081 = vmatpush1.bf16.msra.mxu0 0
    %1082 = vmatprep.subr.bf16.mxu0 0
    %1083 = vmatpush1.bf16.msra.mxu0 0
    %1084 = vmatprep.subr.bf16.mxu0 0
    %1085 = vmatpush1.bf16.msra.mxu0 0
    %1086 = vmatprep.subr.bf16.mxu0 0
    %1087 = vmatpush1.bf16.msra.mxu0 0
    %1088 = vmatprep.mubr.bf16.mxu0 0
    %1089 = vmatmul.mubr.bf16.gmra.mrb[0].mxu0 %v1045
    %v1090 = vpop.f32.mrb[0].mxu0
    %v1091 = vadd.f32 %v1036, %v1090
    %v1092 = vpop.f32.mrb[0].mxu0
    %v1093 = vpop.f32.mrb[0].mxu0
    %v1094 = vadd.f32 %v1036, %v1093
    %v1095 = vpop.f32.mrb[0].mxu0
    %1096 = vmatprep.mubr.bf16.mxu0 0
    %1097 = vmatmul.mubr.bf16.gmra.mrb[0].mxu0 %v1048
    %v1098 = vpop.f32.mrb[0].mxu0
    %v1099 = vadd.f32 %v1036, %v1098
    %v1100 = vpop.f32.mrb[0].mxu0
    %v1101 = vpop.f32.mrb[0].mxu0
    %v1102 = vadd.f32 %v1036, %v1101
    %v1103 = vpop.f32.mrb[0].mxu0
    %1104 = vmatprep.mubr.bf16.mxu0 0
    %1105 = vmatmul.mubr.bf16.gmra.mrb[0].mxu0 %v1051
    %v1106 = vpop.f32.mrb[0].mxu0
    %v1107 = vadd.f32 %v1036, %v1106
    %v1108 = vpop.f32.mrb[0].mxu0
    %v1109 = vpop.f32.mrb[0].mxu0
    %v1110 = vadd.f32 %v1036, %v1109
    %v1111 = vpop.f32.mrb[0].mxu0
    %1112 = vmatprep.mubr.bf16.mxu0 0
    %1113 = vmatmul.mubr.bf16.gmra.mrb[0].mxu0 %v1054
    %v1114 = vpop.f32.mrb[0].mxu0
    %v1115 = vadd.f32 %v1036, %v1114
    %v1116 = vpop.f32.mrb[0].mxu0
    %v1117 = vpop.f32.mrb[0].mxu0
    %v1118 = vadd.f32 %v1036, %v1117
    %v1119 = vpop.f32.mrb[0].mxu0
    %1120 = vdwg.mxu0
    %1121 = vst [vmem:[#allocation2] sm:$0xff] %v1091
    %1122 = vst [vmem:[#allocation2 + $0x8] sm:$0xff] %v1094
    %1123 = vst [vmem:[#allocation2 + $0x10] sm:$0xff] %v1099
    %1124 = vst [vmem:[#allocation2 + $0x18] sm:$0xff] %v1102
    %1125 = vst [vmem:[#allocation2 + $0x20] sm:$0xff] %v1107
    %1126 = vst [vmem:[#allocation2 + $0x28] sm:$0xff] %v1110
    %1127 = vst [vmem:[#allocation2 + $0x30] sm:$0xff] %v1115
    %1128 = vst [vmem:[#allocation2 + $0x38] sm:$0xff] %v1118
    %v1129 = vld [vmem:[%s11] sm:$0xf]
    %v1130 = vld [vmem:[%s11 + $0x4] sm:$0xf]
    %v1131 = vld [vmem:[%s11 + $0x8] sm:$0xf]
    %v1132 = vld [vmem:[%s11 + $0xc] sm:$0xf]
    %v1133 = vld [vmem:[#allocation2] sm:$0xff]
    %v1134 = vpack.c.bf16 %v818, %v818
    %1136 = vrot.lane.b32.xlu0 %v1134, 64
    %v1137 = vpop.permute.xlu0 %1136
    %v1142 = vunpack.c.l.b16 %v1129
    %v1143 = vunpack.c.l.b16 %v1130
    %v1144 = vunpack.c.l.b16 %v1131
    %v1145 = vunpack.c.l.b16 %v1132
    %v1146 = vpack.c.b16 %v1143, %v1142
    %v1147 = vpack.c.b16 %v1145, %v1144
    %v1151 = vsel %vm187, %v1137, 0
    %1153 = vmatprep.subr.bf16.mxu0 0
    %1154 = vmatpush1.bf16.msra.mxu0 %v1146
    %1155 = vmatprep.subr.bf16.mxu0 0
    %1156 = vmatpush1.bf16.msra.mxu0 %v1147
    %1157 = vmatprep.subr.bf16.mxu0 0
    %1158 = vmatpush1.bf16.msra.mxu0 0
    %1159 = vmatprep.subr.bf16.mxu0 0
    %1160 = vmatpush1.bf16.msra.mxu0 0
    %1161 = vmatprep.subr.bf16.mxu0 0
    %1162 = vmatpush1.bf16.msra.mxu0 0
    %1163 = vmatprep.subr.bf16.mxu0 0
    %1164 = vmatpush1.bf16.msra.mxu0 0
    %1165 = vmatprep.subr.bf16.mxu0 0
    %1166 = vmatpush1.bf16.msra.mxu0 0
    %1167 = vmatprep.subr.bf16.mxu0 0
    %1168 = vmatpush1.bf16.msra.mxu0 0
    %1169 = vmatprep.subr.bf16.mxu0 0
    %1170 = vmatpush1.bf16.msra.mxu0 0
    %1171 = vmatprep.subr.bf16.mxu0 0
    %1172 = vmatpush1.bf16.msra.mxu0 0
    %1173 = vmatprep.subr.bf16.mxu0 0
    %1174 = vmatpush1.bf16.msra.mxu0 0
    %1175 = vmatprep.subr.bf16.mxu0 0
    %1176 = vmatpush1.bf16.msra.mxu0 0
    %1177 = vmatprep.subr.bf16.mxu0 0
    %1178 = vmatpush1.bf16.msra.mxu0 0
    %1179 = vmatprep.subr.bf16.mxu0 0
    %1180 = vmatpush1.bf16.msra.mxu0 0
    %1181 = vmatprep.subr.bf16.mxu0 0
    %1182 = vmatpush1.bf16.msra.mxu0 0
    %1183 = vmatprep.subr.bf16.mxu0 0
    %1184 = vmatpush1.bf16.msra.mxu0 0
    %1185 = vmatprep.mubr.bf16.mxu0 0
    %1186 = vmatmul.mubr.bf16.gmra.mrb[0].mxu0 %v1151
    %v1187 = vpop.f32.mrb[0].mxu0
    %v1188 = vadd.f32 0.0, %v1187
    %v1189 = vpop.f32.mrb[0].mxu0
    %v1190 = vpop.f32.mrb[0].mxu0
    %v1191 = vpop.f32.mrb[0].mxu0
    %1192 = vdwg.mxu0
    %v1193 = vadd.f32 %v1133, %v1188
    %v1194 = vxor.u32 %v1193, 2147483648
    %v1195 = vmul.f32 %v1194, 1.442695
    %v1196 = vpow.pop %v1195
    %v1197 = vadd.f32 %v1196, 1.0
    %v1198 = vrcp.pop %v1197
    %v1199 = vmul.f32 1.0, %v1198
    %v1200 = vtanh.pop %v1193
    %v1201 = vmul.f32 %v1199, %v812
    %1203 = vrot.lane.b32.xlu0 %v1200, 32
    %v1204 = vpop.permute.xlu0 %1203
    %v1206 = vmul.f32 %v1199, %v1204
    %1208 = vrot.lane.b32.xlu0 %v1206, 32
    %v1209 = vpop.permute.xlu0 %1208
    %v1211 = vadd.f32 %v1201, %v1209
    %v1212 = vtanh.pop %v1211
    %1214 = vrot.lane.b32.xlu0 %v1212, 32
    %v1215 = vpop.permute.xlu0 %1214
    %v1217 = vmul.f32 %v1199, %v1215
    %1219 = vrot.lane.b32.xlu0 %v1217, 64
    %v1220 = vpop.permute.xlu0 %1219
    %1222 = vst.msk [vmem:[#allocation3] sm:$0xff] %vm187, %v1220
    %v1223 = vld [vmem:[%s265] sm:$0xff]
    %v1224 = vpack.c.bf16 %v1217, %v1217
    %1226 = vrot.lane.b32.xlu0 %v1224, 64
    %v1227 = vpop.permute.xlu0 %1226
    %v1229 = vsel %vm187, %v1227, 0
    %1231 = vmatprep.subr.bf16.mxu0 0
    %1232 = vmatpush1.bf16.msra.mxu0 %v1146
    %1233 = vmatprep.subr.bf16.mxu0 0
    %1234 = vmatpush1.bf16.msra.mxu0 %v1147
    %1235 = vmatprep.subr.bf16.mxu0 0
    %1236 = vmatpush1.bf16.msra.mxu0 0
    %1237 = vmatprep.subr.bf16.mxu0 0
    %1238 = vmatpush1.bf16.msra.mxu0 0
    %1239 = vmatprep.subr.bf16.mxu0 0
    %1240 = vmatpush1.bf16.msra.mxu0 0
    %1241 = vmatprep.subr.bf16.mxu0 0
    %1242 = vmatpush1.bf16.msra.mxu0 0
    %1243 = vmatprep.subr.bf16.mxu0 0
    %1244 = vmatpush1.bf16.msra.mxu0 0
    %1245 = vmatprep.subr.bf16.mxu0 0
    %1246 = vmatpush1.bf16.msra.mxu0 0
    %1247 = vmatprep.subr.bf16.mxu0 0
    %1248 = vmatpush1.bf16.msra.mxu0 0
    %1249 = vmatprep.subr.bf16.mxu0 0
    %1250 = vmatpush1.bf16.msra.mxu0 0
    %1251 = vmatprep.subr.bf16.mxu0 0
    %1252 = vmatpush1.bf16.msra.mxu0 0
    %1253 = vmatprep.subr.bf16.mxu0 0
    %1254 = vmatpush1.bf16.msra.mxu0 0
    %1255 = vmatprep.subr.bf16.mxu0 0
    %1256 = vmatpush1.bf16.msra.mxu0 0
    %1257 = vmatprep.subr.bf16.mxu0 0
    %1258 = vmatpush1.bf16.msra.mxu0 0
    %1259 = vmatprep.subr.bf16.mxu0 0
    %1260 = vmatpush1.bf16.msra.mxu0 0
    %1261 = vmatprep.subr.bf16.mxu0 0
    %1262 = vmatpush1.bf16.msra.mxu0 0
    %1263 = vmatprep.mubr.bf16.mxu0 0
    %1264 = vmatmul.mubr.bf16.gmra.mrb[0].mxu0 %v1229
    %v1265 = vpop.f32.mrb[0].mxu0
    %v1266 = vadd.f32 0.0, %v1265
    %v1267 = vpop.f32.mrb[0].mxu0
    %v1268 = vpop.f32.mrb[0].mxu0
    %v1269 = vpop.f32.mrb[0].mxu0
    %1270 = vdwg.mxu0
    %v1271 = vadd.f32 %v1223, %v1266
    %v1272 = vxor.u32 %v1271, 2147483648
    %v1273 = vmul.f32 %v1272, 1.442695
    %v1274 = vpow.pop %v1273
    %v1275 = vadd.f32 %v1274, 1.0
    %v1276 = vrcp.pop %v1275
    %v1277 = vmul.f32 1.0, %v1276
    %v1278 = vtanh.pop %v1271
    %v1279 = vmul.f32 %v1277, %v1211
    %1281 = vrot.lane.b32.xlu0 %v1278, 32
    %v1282 = vpop.permute.xlu0 %1281
    %v1284 = vmul.f32 %v1277, %v1282
    %1286 = vrot.lane.b32.xlu0 %v1284, 32
    %v1287 = vpop.permute.xlu0 %1286
    %v1289 = vadd.f32 %v1279, %v1287
    %v1290 = vtanh.pop %v1289
    %1292 = vrot.lane.b32.xlu0 %v1290, 32
    %v1293 = vpop.permute.xlu0 %1292
    %v1295 = vmul.f32 %v1277, %v1293
    %1297 = vrot.lane.b32.xlu0 %v1295, 64
    %v1298 = vpop.permute.xlu0 %1297
    %1300 = vst.msk [vmem:[%s343] sm:$0xff] %vm187, %v1298
    %v1301 = vld [vmem:[%s345] sm:$0xff]
    %v1302 = vpack.c.bf16 %v1295, %v1295
    %1304 = vrot.lane.b32.xlu0 %v1302, 64
    %v1305 = vpop.permute.xlu0 %1304
    %v1307 = vsel %vm187, %v1305, 0
    %1309 = vmatprep.subr.bf16.mxu0 0
    %1310 = vmatpush1.bf16.msra.mxu0 %v1146
    %1311 = vmatprep.subr.bf16.mxu0 0
    %1312 = vmatpush1.bf16.msra.mxu0 %v1147
    %1313 = vmatprep.subr.bf16.mxu0 0
    %1314 = vmatpush1.bf16.msra.mxu0 0
    %1315 = vmatprep.subr.bf16.mxu0 0
    %1316 = vmatpush1.bf16.msra.mxu0 0
    %1317 = vmatprep.subr.bf16.mxu0 0
    %1318 = vmatpush1.bf16.msra.mxu0 0
    %1319 = vmatprep.subr.bf16.mxu0 0
    %1320 = vmatpush1.bf16.msra.mxu0 0
    %1321 = vmatprep.subr.bf16.mxu0 0
    %1322 = vmatpush1.bf16.msra.mxu0 0
    %1323 = vmatprep.subr.bf16.mxu0 0
    %1324 = vmatpush1.bf16.msra.mxu0 0
    %1325 = vmatprep.subr.bf16.mxu0 0
    %1326 = vmatpush1.bf16.msra.mxu0 0
    %1327 = vmatprep.subr.bf16.mxu0 0
    %1328 = vmatpush1.bf16.msra.mxu0 0
    %1329 = vmatprep.subr.bf16.mxu0 0
    %1330 = vmatpush1.bf16.msra.mxu0 0
    %1331 = vmatprep.subr.bf16.mxu0 0
    %1332 = vmatpush1.bf16.msra.mxu0 0
    %1333 = vmatprep.subr.bf16.mxu0 0
    %1334 = vmatpush1.bf16.msra.mxu0 0
    %1335 = vmatprep.subr.bf16.mxu0 0
    %1336 = vmatpush1.bf16.msra.mxu0 0
    %1337 = vmatprep.subr.bf16.mxu0 0
    %1338 = vmatpush1.bf16.msra.mxu0 0
    %1339 = vmatprep.subr.bf16.mxu0 0
    %1340 = vmatpush1.bf16.msra.mxu0 0
    %1341 = vmatprep.mubr.bf16.mxu0 0
    %1342 = vmatmul.mubr.bf16.gmra.mrb[0].mxu0 %v1307
    %v1343 = vpop.f32.mrb[0].mxu0
    %v1344 = vadd.f32 0.0, %v1343
    %v1345 = vpop.f32.mrb[0].mxu0
    %v1346 = vpop.f32.mrb[0].mxu0
    %v1347 = vpop.f32.mrb[0].mxu0
    %1348 = vdwg.mxu0
    %v1349 = vadd.f32 %v1301, %v1344
    %v1350 = vxor.u32 %v1349, 2147483648
    %v1351 = vmul.f32 %v1350, 1.442695
    %v1352 = vpow.pop %v1351
    %v1353 = vadd.f32 %v1352, 1.0
    %v1354 = vrcp.pop %v1353
    %v1355 = vmul.f32 1.0, %v1354
    %v1356 = vtanh.pop %v1349
    %v1357 = vmul.f32 %v1355, %v1289
    %1359 = vrot.lane.b32.xlu0 %v1356, 32
    %v1360 = vpop.permute.xlu0 %1359
    %v1362 = vmul.f32 %v1355, %v1360
    %1364 = vrot.lane.b32.xlu0 %v1362, 32
    %v1365 = vpop.permute.xlu0 %1364
    %v1367 = vadd.f32 %v1357, %v1365
    %v1368 = vtanh.pop %v1367
    %1370 = vrot.lane.b32.xlu0 %v1368, 32
    %v1371 = vpop.permute.xlu0 %1370
    %v1373 = vmul.f32 %v1355, %v1371
    %1375 = vrot.lane.b32.xlu0 %v1373, 64
    %v1376 = vpop.permute.xlu0 %1375
    %1378 = vst.msk [vmem:[%s423] sm:$0xff] %vm187, %v1376
    %v1379 = vld [vmem:[%s425] sm:$0xff]
    %v1380 = vpack.c.bf16 %v1373, %v1373
    %1382 = vrot.lane.b32.xlu0 %v1380, 64
    %v1383 = vpop.permute.xlu0 %1382
    %v1385 = vsel %vm187, %v1383, 0
    %1387 = vmatprep.subr.bf16.mxu0 0
    %1388 = vmatpush1.bf16.msra.mxu0 %v1146
    %1389 = vmatprep.subr.bf16.mxu0 0
    %1390 = vmatpush1.bf16.msra.mxu0 %v1147
    %1391 = vmatprep.subr.bf16.mxu0 0
    %1392 = vmatpush1.bf16.msra.mxu0 0
    %1393 = vmatprep.subr.bf16.mxu0 0
    %1394 = vmatpush1.bf16.msra.mxu0 0
    %1395 = vmatprep.subr.bf16.mxu0 0
    %1396 = vmatpush1.bf16.msra.mxu0 0
    %1397 = vmatprep.subr.bf16.mxu0 0
    %1398 = vmatpush1.bf16.msra.mxu0 0
    %1399 = vmatprep.subr.bf16.mxu0 0
    %1400 = vmatpush1.bf16.msra.mxu0 0
    %1401 = vmatprep.subr.bf16.mxu0 0
    %1402 = vmatpush1.bf16.msra.mxu0 0
    %1403 = vmatprep.subr.bf16.mxu0 0
    %1404 = vmatpush1.bf16.msra.mxu0 0
    %1405 = vmatprep.subr.bf16.mxu0 0
    %1406 = vmatpush1.bf16.msra.mxu0 0
    %1407 = vmatprep.subr.bf16.mxu0 0
    %1408 = vmatpush1.bf16.msra.mxu0 0
    %1409 = vmatprep.subr.bf16.mxu0 0
    %1410 = vmatpush1.bf16.msra.mxu0 0
    %1411 = vmatprep.subr.bf16.mxu0 0
    %1412 = vmatpush1.bf16.msra.mxu0 0
    %1413 = vmatprep.subr.bf16.mxu0 0
    %1414 = vmatpush1.bf16.msra.mxu0 0
    %1415 = vmatprep.subr.bf16.mxu0 0
    %1416 = vmatpush1.bf16.msra.mxu0 0
    %1417 = vmatprep.subr.bf16.mxu0 0
    %1418 = vmatpush1.bf16.msra.mxu0 0
    %1419 = vmatprep.mubr.bf16.mxu0 0
    %1420 = vmatmul.mubr.bf16.gmra.mrb[0].mxu0 %v1385
    %v1421 = vpop.f32.mrb[0].mxu0
    %v1422 = vadd.f32 0.0, %v1421
    %v1423 = vpop.f32.mrb[0].mxu0
    %v1424 = vpop.f32.mrb[0].mxu0
    %v1425 = vpop.f32.mrb[0].mxu0
    %1426 = vdwg.mxu0
    %v1427 = vadd.f32 %v1379, %v1422
    %v1428 = vxor.u32 %v1427, 2147483648
    %v1429 = vmul.f32 %v1428, 1.442695
    %v1430 = vpow.pop %v1429
    %v1431 = vadd.f32 %v1430, 1.0
    %v1432 = vrcp.pop %v1431
    %v1433 = vmul.f32 1.0, %v1432
    %v1434 = vtanh.pop %v1427
    %v1435 = vmul.f32 %v1433, %v1367
    %1437 = vrot.lane.b32.xlu0 %v1434, 32
    %v1438 = vpop.permute.xlu0 %1437
    %v1440 = vmul.f32 %v1433, %v1438
    %1442 = vrot.lane.b32.xlu0 %v1440, 32
    %v1443 = vpop.permute.xlu0 %1442
    %v1445 = vadd.f32 %v1435, %v1443
    %v1446 = vtanh.pop %v1445
    %1448 = vrot.lane.b32.xlu0 %v1446, 32
    %v1449 = vpop.permute.xlu0 %1448
    %v1451 = vmul.f32 %v1433, %v1449
    %1453 = vrot.lane.b32.xlu0 %v1451, 64
    %v1454 = vpop.permute.xlu0 %1453
    %1456 = vst.msk [vmem:[%s503] sm:$0xff] %vm187, %v1454
    %v1457 = vld [vmem:[%s505] sm:$0xff]
    %v1458 = vpack.c.bf16 %v1451, %v1451
    %1460 = vrot.lane.b32.xlu0 %v1458, 64
    %v1461 = vpop.permute.xlu0 %1460
    %v1463 = vsel %vm187, %v1461, 0
    %1465 = vmatprep.subr.bf16.mxu0 0
    %1466 = vmatpush1.bf16.msra.mxu0 %v1146
    %1467 = vmatprep.subr.bf16.mxu0 0
    %1468 = vmatpush1.bf16.msra.mxu0 %v1147
    %1469 = vmatprep.subr.bf16.mxu0 0
    %1470 = vmatpush1.bf16.msra.mxu0 0
    %1471 = vmatprep.subr.bf16.mxu0 0
    %1472 = vmatpush1.bf16.msra.mxu0 0
    %1473 = vmatprep.subr.bf16.mxu0 0
    %1474 = vmatpush1.bf16.msra.mxu0 0
    %1475 = vmatprep.subr.bf16.mxu0 0
    %1476 = vmatpush1.bf16.msra.mxu0 0
    %1477 = vmatprep.subr.bf16.mxu0 0
    %1478 = vmatpush1.bf16.msra.mxu0 0
    %1479 = vmatprep.subr.bf16.mxu0 0
    %1480 = vmatpush1.bf16.msra.mxu0 0
    %1481 = vmatprep.subr.bf16.mxu0 0
    %1482 = vmatpush1.bf16.msra.mxu0 0
    %1483 = vmatprep.subr.bf16.mxu0 0
    %1484 = vmatpush1.bf16.msra.mxu0 0
    %1485 = vmatprep.subr.bf16.mxu0 0
    %1486 = vmatpush1.bf16.msra.mxu0 0
    %1487 = vmatprep.subr.bf16.mxu0 0
    %1488 = vmatpush1.bf16.msra.mxu0 0
    %1489 = vmatprep.subr.bf16.mxu0 0
    %1490 = vmatpush1.bf16.msra.mxu0 0
    %1491 = vmatprep.subr.bf16.mxu0 0
    %1492 = vmatpush1.bf16.msra.mxu0 0
    %1493 = vmatprep.subr.bf16.mxu0 0
    %1494 = vmatpush1.bf16.msra.mxu0 0
    %1495 = vmatprep.subr.bf16.mxu0 0
    %1496 = vmatpush1.bf16.msra.mxu0 0
    %1497 = vmatprep.mubr.bf16.mxu0 0
    %1498 = vmatmul.mubr.bf16.gmra.mrb[0].mxu0 %v1463
    %v1499 = vpop.f32.mrb[0].mxu0
    %v1500 = vadd.f32 0.0, %v1499
    %v1501 = vpop.f32.mrb[0].mxu0
    %v1502 = vpop.f32.mrb[0].mxu0
    %v1503 = vpop.f32.mrb[0].mxu0
    %1504 = vdwg.mxu0
    %v1505 = vadd.f32 %v1457, %v1500
    %v1506 = vxor.u32 %v1505, 2147483648
    %v1507 = vmul.f32 %v1506, 1.442695
    %v1508 = vpow.pop %v1507
    %v1509 = vadd.f32 %v1508, 1.0
    %v1510 = vrcp.pop %v1509
    %v1511 = vmul.f32 1.0, %v1510
    %v1512 = vtanh.pop %v1505
    %v1513 = vmul.f32 %v1511, %v1445
    %1515 = vrot.lane.b32.xlu0 %v1512, 32
    %v1516 = vpop.permute.xlu0 %1515
    %v1518 = vmul.f32 %v1511, %v1516
    %1520 = vrot.lane.b32.xlu0 %v1518, 32
    %v1521 = vpop.permute.xlu0 %1520
    %v1523 = vadd.f32 %v1513, %v1521
    %v1524 = vtanh.pop %v1523
    %1526 = vrot.lane.b32.xlu0 %v1524, 32
    %v1527 = vpop.permute.xlu0 %1526
    %v1529 = vmul.f32 %v1511, %v1527
    %1531 = vrot.lane.b32.xlu0 %v1529, 64
    %v1532 = vpop.permute.xlu0 %1531
    %1534 = vst.msk [vmem:[%s583] sm:$0xff] %vm187, %v1532
    %v1535 = vld [vmem:[%s585] sm:$0xff]
    %v1536 = vpack.c.bf16 %v1529, %v1529
    %1538 = vrot.lane.b32.xlu0 %v1536, 64
    %v1539 = vpop.permute.xlu0 %1538
    %v1541 = vsel %vm187, %v1539, 0
    %1543 = vmatprep.subr.bf16.mxu0 0
    %1544 = vmatpush1.bf16.msra.mxu0 %v1146
    %1545 = vmatprep.subr.bf16.mxu0 0
    %1546 = vmatpush1.bf16.msra.mxu0 %v1147
    %1547 = vmatprep.subr.bf16.mxu0 0
    %1548 = vmatpush1.bf16.msra.mxu0 0
    %1549 = vmatprep.subr.bf16.mxu0 0
    %1550 = vmatpush1.bf16.msra.mxu0 0
    %1551 = vmatprep.subr.bf16.mxu0 0
    %1552 = vmatpush1.bf16.msra.mxu0 0
    %1553 = vmatprep.subr.bf16.mxu0 0
    %1554 = vmatpush1.bf16.msra.mxu0 0
    %1555 = vmatprep.subr.bf16.mxu0 0
    %1556 = vmatpush1.bf16.msra.mxu0 0
    %1557 = vmatprep.subr.bf16.mxu0 0
    %1558 = vmatpush1.bf16.msra.mxu0 0
    %1559 = vmatprep.subr.bf16.mxu0 0
    %1560 = vmatpush1.bf16.msra.mxu0 0
    %1561 = vmatprep.subr.bf16.mxu0 0
    %1562 = vmatpush1.bf16.msra.mxu0 0
    %1563 = vmatprep.subr.bf16.mxu0 0
    %1564 = vmatpush1.bf16.msra.mxu0 0
    %1565 = vmatprep.subr.bf16.mxu0 0
    %1566 = vmatpush1.bf16.msra.mxu0 0
    %1567 = vmatprep.subr.bf16.mxu0 0
    %1568 = vmatpush1.bf16.msra.mxu0 0
    %1569 = vmatprep.subr.bf16.mxu0 0
    %1570 = vmatpush1.bf16.msra.mxu0 0
    %1571 = vmatprep.subr.bf16.mxu0 0
    %1572 = vmatpush1.bf16.msra.mxu0 0
    %1573 = vmatprep.subr.bf16.mxu0 0
    %1574 = vmatpush1.bf16.msra.mxu0 0
    %1575 = vmatprep.mubr.bf16.mxu0 0
    %1576 = vmatmul.mubr.bf16.gmra.mrb[0].mxu0 %v1541
    %v1577 = vpop.f32.mrb[0].mxu0
    %v1578 = vadd.f32 0.0, %v1577
    %v1579 = vpop.f32.mrb[0].mxu0
    %v1580 = vpop.f32.mrb[0].mxu0
    %v1581 = vpop.f32.mrb[0].mxu0
    %1582 = vdwg.mxu0
    %v1583 = vadd.f32 %v1535, %v1578
    %v1584 = vxor.u32 %v1583, 2147483648
    %v1585 = vmul.f32 %v1584, 1.442695
    %v1586 = vpow.pop %v1585
    %v1587 = vadd.f32 %v1586, 1.0
    %v1588 = vrcp.pop %v1587
    %v1589 = vmul.f32 1.0, %v1588
    %v1590 = vtanh.pop %v1583
    %v1591 = vmul.f32 %v1589, %v1523
    %1593 = vrot.lane.b32.xlu0 %v1590, 32
    %v1594 = vpop.permute.xlu0 %1593
    %v1596 = vmul.f32 %v1589, %v1594
    %1598 = vrot.lane.b32.xlu0 %v1596, 32
    %v1599 = vpop.permute.xlu0 %1598
    %v1601 = vadd.f32 %v1591, %v1599
    %v1602 = vtanh.pop %v1601
    %1604 = vrot.lane.b32.xlu0 %v1602, 32
    %v1605 = vpop.permute.xlu0 %1604
    %v1607 = vmul.f32 %v1589, %v1605
    %1609 = vrot.lane.b32.xlu0 %v1607, 64
    %v1610 = vpop.permute.xlu0 %1609
    %1612 = vst.msk [vmem:[%s663] sm:$0xff] %vm187, %v1610
    %v1613 = vld [vmem:[%s665] sm:$0xff]
    %v1614 = vpack.c.bf16 %v1607, %v1607
    %1616 = vrot.lane.b32.xlu0 %v1614, 64
    %v1617 = vpop.permute.xlu0 %1616
    %v1619 = vsel %vm187, %v1617, 0
    %1621 = vmatprep.subr.bf16.mxu0 0
    %1622 = vmatpush1.bf16.msra.mxu0 %v1146
    %1623 = vmatprep.subr.bf16.mxu0 0
    %1624 = vmatpush1.bf16.msra.mxu0 %v1147
    %1625 = vmatprep.subr.bf16.mxu0 0
    %1626 = vmatpush1.bf16.msra.mxu0 0
    %1627 = vmatprep.subr.bf16.mxu0 0
    %1628 = vmatpush1.bf16.msra.mxu0 0
    %1629 = vmatprep.subr.bf16.mxu0 0
    %1630 = vmatpush1.bf16.msra.mxu0 0
    %1631 = vmatprep.subr.bf16.mxu0 0
    %1632 = vmatpush1.bf16.msra.mxu0 0
    %1633 = vmatprep.subr.bf16.mxu0 0
    %1634 = vmatpush1.bf16.msra.mxu0 0
    %1635 = vmatprep.subr.bf16.mxu0 0
    %1636 = vmatpush1.bf16.msra.mxu0 0
    %1637 = vmatprep.subr.bf16.mxu0 0
    %1638 = vmatpush1.bf16.msra.mxu0 0
    %1639 = vmatprep.subr.bf16.mxu0 0
    %1640 = vmatpush1.bf16.msra.mxu0 0
    %1641 = vmatprep.subr.bf16.mxu0 0
    %1642 = vmatpush1.bf16.msra.mxu0 0
    %1643 = vmatprep.subr.bf16.mxu0 0
    %1644 = vmatpush1.bf16.msra.mxu0 0
    %1645 = vmatprep.subr.bf16.mxu0 0
    %1646 = vmatpush1.bf16.msra.mxu0 0
    %1647 = vmatprep.subr.bf16.mxu0 0
    %1648 = vmatpush1.bf16.msra.mxu0 0
    %1649 = vmatprep.subr.bf16.mxu0 0
    %1650 = vmatpush1.bf16.msra.mxu0 0
    %1651 = vmatprep.subr.bf16.mxu0 0
    %1652 = vmatpush1.bf16.msra.mxu0 0
    %1653 = vmatprep.mubr.bf16.mxu0 0
    %1654 = vmatmul.mubr.bf16.gmra.mrb[0].mxu0 %v1619
    %v1655 = vpop.f32.mrb[0].mxu0
    %v1656 = vadd.f32 0.0, %v1655
    %v1657 = vpop.f32.mrb[0].mxu0
    %v1658 = vpop.f32.mrb[0].mxu0
    %v1659 = vpop.f32.mrb[0].mxu0
    %1660 = vdwg.mxu0
    %v1661 = vadd.f32 %v1613, %v1656
    %v1662 = vxor.u32 %v1661, 2147483648
    %v1663 = vmul.f32 %v1662, 1.442695
    %v1664 = vpow.pop %v1663
    %v1665 = vadd.f32 %v1664, 1.0
    %v1666 = vrcp.pop %v1665
    %v1667 = vmul.f32 1.0, %v1666
    %v1668 = vtanh.pop %v1661
    %v1669 = vmul.f32 %v1667, %v1601
    %1671 = vrot.lane.b32.xlu0 %v1668, 32
    %v1672 = vpop.permute.xlu0 %1671
    %v1674 = vmul.f32 %v1667, %v1672
    %1676 = vrot.lane.b32.xlu0 %v1674, 32
    %v1677 = vpop.permute.xlu0 %1676
    %v1679 = vadd.f32 %v1669, %v1677
    %v1680 = vtanh.pop %v1679
    %1682 = vrot.lane.b32.xlu0 %v1680, 32
    %v1683 = vpop.permute.xlu0 %1682
    %v1685 = vmul.f32 %v1667, %v1683
    %1687 = vrot.lane.b32.xlu0 %v1685, 64
    %v1688 = vpop.permute.xlu0 %1687
    %1690 = vst.msk [vmem:[%s743] sm:$0xff] %vm187, %v1688
    %v1691 = vld [vmem:[%s745] sm:$0xff]
    %v1692 = vpack.c.bf16 %v1685, %v1685
    %1694 = vrot.lane.b32.xlu0 %v1692, 64
    %v1695 = vpop.permute.xlu0 %1694
    %v1697 = vsel %vm187, %v1695, 0
    %1699 = vmatprep.subr.bf16.mxu0 0
    %1700 = vmatpush1.bf16.msra.mxu0 %v1146
    %1701 = vmatprep.subr.bf16.mxu0 0
    %1702 = vmatpush1.bf16.msra.mxu0 %v1147
    %1703 = vmatprep.subr.bf16.mxu0 0
    %1704 = vmatpush1.bf16.msra.mxu0 0
    %1705 = vmatprep.subr.bf16.mxu0 0
    %1706 = vmatpush1.bf16.msra.mxu0 0
    %1707 = vmatprep.subr.bf16.mxu0 0
    %1708 = vmatpush1.bf16.msra.mxu0 0
    %1709 = vmatprep.subr.bf16.mxu0 0
    %1710 = vmatpush1.bf16.msra.mxu0 0
    %1711 = vmatprep.subr.bf16.mxu0 0
    %1712 = vmatpush1.bf16.msra.mxu0 0
    %1713 = vmatprep.subr.bf16.mxu0 0
    %1714 = vmatpush1.bf16.msra.mxu0 0
    %1715 = vmatprep.subr.bf16.mxu0 0
    %1716 = vmatpush1.bf16.msra.mxu0 0
    %1717 = vmatprep.subr.bf16.mxu0 0
    %1718 = vmatpush1.bf16.msra.mxu0 0
    %1719 = vmatprep.subr.bf16.mxu0 0
    %1720 = vmatpush1.bf16.msra.mxu0 0
    %1721 = vmatprep.subr.bf16.mxu0 0
    %1722 = vmatpush1.bf16.msra.mxu0 0
    %1723 = vmatprep.subr.bf16.mxu0 0
    %1724 = vmatpush1.bf16.msra.mxu0 0
    %1725 = vmatprep.subr.bf16.mxu0 0
    %1726 = vmatpush1.bf16.msra.mxu0 0
    %1727 = vmatprep.subr.bf16.mxu0 0
    %1728 = vmatpush1.bf16.msra.mxu0 0
    %1729 = vmatprep.subr.bf16.mxu0 0
    %1730 = vmatpush1.bf16.msra.mxu0 0
    %1731 = vmatprep.mubr.bf16.mxu0 0
    %1732 = vmatmul.mubr.bf16.gmra.mrb[0].mxu0 %v1697
    %v1733 = vpop.f32.mrb[0].mxu0
    %v1734 = vadd.f32 0.0, %v1733
    %v1735 = vpop.f32.mrb[0].mxu0
    %v1736 = vpop.f32.mrb[0].mxu0
    %v1737 = vpop.f32.mrb[0].mxu0
    %1738 = vdwg.mxu0
    %v1739 = vadd.f32 %v1691, %v1734
    %v1740 = vxor.u32 %v1739, 2147483648
    %v1741 = vmul.f32 %v1740, 1.442695
    %v1742 = vpow.pop %v1741
    %v1743 = vadd.f32 %v1742, 1.0
    %v1744 = vrcp.pop %v1743
    %v1745 = vmul.f32 1.0, %v1744
    %v1746 = vtanh.pop %v1739
    %v1747 = vmul.f32 %v1745, %v1679
    %1749 = vrot.lane.b32.xlu0 %v1746, 32
    %v1750 = vpop.permute.xlu0 %1749
    %v1752 = vmul.f32 %v1745, %v1750
    %1754 = vrot.lane.b32.xlu0 %v1752, 32
    %v1755 = vpop.permute.xlu0 %1754
    %v1757 = vadd.f32 %v1747, %v1755
    %v1758 = vtanh.pop %v1757
    %1760 = vrot.lane.b32.xlu0 %v1758, 32
    %v1761 = vpop.permute.xlu0 %1760
    %v1763 = vmul.f32 %v1745, %v1761
    %1765 = vrot.lane.b32.xlu0 %v1763, 64
    %v1766 = vpop.permute.xlu0 %1765
    %1768 = vst.msk [vmem:[%s823] sm:$0xff] %vm187, %v1766
    %v1769 = vld [vmem:[#allocation3] sm:$0xff]
    %v1770 = vld [vmem:[#allocation3 + $0x8] sm:$0xff]
    %v1771 = vld [vmem:[#allocation3 + $0x10] sm:$0xff]
    %v1772 = vld [vmem:[#allocation3 + $0x18] sm:$0xff]
    %v1773 = vld [vmem:[#allocation3 + $0x20] sm:$0xff]
    %v1774 = vld [vmem:[#allocation3 + $0x28] sm:$0xff]
    %v1775 = vld [vmem:[#allocation3 + $0x30] sm:$0xff]
    %v1776 = vld [vmem:[#allocation3 + $0x38] sm:$0xff]
    %v1777 = vpack.c.bf16 %v1770, %v1769
    %v1778 = vpack.c.bf16 %v1772, %v1771
    %v1779 = vpack.c.bf16 %v1774, %v1773
    %v1780 = vpack.c.bf16 %v1776, %v1775
    %v1781 = vld [vmem:[%s12] sm:$0xf]
    %v1782 = vld [vmem:[%s12 + $0x4] sm:$0xf]
    %v1783 = vld [vmem:[%s12 + $0x8] sm:$0xf]
    %v1784 = vld [vmem:[%s12 + $0xc] sm:$0xf]
    %v1785 = vld [vmem:[%s13] sm:$0x1]
    %v1787 = vlaneseq
    %v1788 = vshrl.u32 %v1787, 7
    %v1789 = vsub.s32 0, %v1788
    %v1790 = vrot.slane %v1785, %v1789
    %v1796 = vunpack.c.l.b16 %v1781
    %v1797 = vunpack.c.l.b16 %v1782
    %v1798 = vunpack.c.l.b16 %v1783
    %v1799 = vunpack.c.l.b16 %v1784
    %v1800 = vpack.c.b16 %v1797, %v1796
    %v1801 = vpack.c.b16 %v1799, %v1798
    %v1805 = vsel %vm187, %v1777, 0
    %v1808 = vsel %vm187, %v1778, 0
    %v1811 = vsel %vm187, %v1779, 0
    %v1814 = vsel %vm187, %v1780, 0
    %1816 = vmatprep.subr.bf16.mxu0 0
    %1817 = vmatpush1.bf16.msra.mxu0 %v1800
    %1818 = vmatprep.subr.bf16.mxu0 0
    %1819 = vmatpush1.bf16.msra.mxu0 %v1801
    %1820 = vmatprep.subr.bf16.mxu0 0
    %1821 = vmatpush1.bf16.msra.mxu0 0
    %1822 = vmatprep.subr.bf16.mxu0 0
    %1823 = vmatpush1.bf16.msra.mxu0 0
    %1824 = vmatprep.subr.bf16.mxu0 0
    %1825 = vmatpush1.bf16.msra.mxu0 0
    %1826 = vmatprep.subr.bf16.mxu0 0
    %1827 = vmatpush1.bf16.msra.mxu0 0
    %1828 = vmatprep.subr.bf16.mxu0 0
    %1829 = vmatpush1.bf16.msra.mxu0 0
    %1830 = vmatprep.subr.bf16.mxu0 0
    %1831 = vmatpush1.bf16.msra.mxu0 0
    %1832 = vmatprep.subr.bf16.mxu0 0
    %1833 = vmatpush1.bf16.msra.mxu0 0
    %1834 = vmatprep.subr.bf16.mxu0 0
    %1835 = vmatpush1.bf16.msra.mxu0 0
    %1836 = vmatprep.subr.bf16.mxu0 0
    %1837 = vmatpush1.bf16.msra.mxu0 0
    %1838 = vmatprep.subr.bf16.mxu0 0
    %1839 = vmatpush1.bf16.msra.mxu0 0
    %1840 = vmatprep.subr.bf16.mxu0 0
    %1841 = vmatpush1.bf16.msra.mxu0 0
    %1842 = vmatprep.subr.bf16.mxu0 0
    %1843 = vmatpush1.bf16.msra.mxu0 0
    %1844 = vmatprep.subr.bf16.mxu0 0
    %1845 = vmatpush1.bf16.msra.mxu0 0
    %1846 = vmatprep.subr.bf16.mxu0 0
    %1847 = vmatpush1.bf16.msra.mxu0 0
    %1848 = vmatprep.mubr.bf16.mxu0 0
    %1849 = vmatmul.mubr.bf16.gmra.mrb[0].mxu0 %v1805
    %v1850 = vpop.f32.mrb[0].mxu0
    %v1851 = vadd.f32 %v1790, %v1850
    %v1852 = vpop.f32.mrb[0].mxu0
    %v1853 = vpop.f32.mrb[0].mxu0
    %v1854 = vadd.f32 %v1790, %v1853
    %v1855 = vpop.f32.mrb[0].mxu0
    %1856 = vmatprep.mubr.bf16.mxu0 0
    %1857 = vmatmul.mubr.bf16.gmra.mrb[0].mxu0 %v1808
    %v1858 = vpop.f32.mrb[0].mxu0
    %v1859 = vadd.f32 %v1790, %v1858
    %v1860 = vpop.f32.mrb[0].mxu0
    %v1861 = vpop.f32.mrb[0].mxu0
    %v1862 = vadd.f32 %v1790, %v1861
    %v1863 = vpop.f32.mrb[0].mxu0
    %1864 = vmatprep.mubr.bf16.mxu0 0
    %1865 = vmatmul.mubr.bf16.gmra.mrb[0].mxu0 %v1811
    %v1866 = vpop.f32.mrb[0].mxu0
    %v1867 = vadd.f32 %v1790, %v1866
    %v1868 = vpop.f32.mrb[0].mxu0
    %v1869 = vpop.f32.mrb[0].mxu0
    %v1870 = vadd.f32 %v1790, %v1869
    %v1871 = vpop.f32.mrb[0].mxu0
    %1872 = vmatprep.mubr.bf16.mxu0 0
    %1873 = vmatmul.mubr.bf16.gmra.mrb[0].mxu0 %v1814
    %v1874 = vpop.f32.mrb[0].mxu0
    %v1875 = vadd.f32 %v1790, %v1874
    %v1876 = vpop.f32.mrb[0].mxu0
    %v1877 = vpop.f32.mrb[0].mxu0
    %v1878 = vadd.f32 %v1790, %v1877
    %v1879 = vpop.f32.mrb[0].mxu0
    %1880 = vdwg.mxu0
    %v1881 = vxor.u32 %v1851, 2147483648
    %v1882 = vxor.u32 %v1854, 2147483648
    %v1883 = vxor.u32 %v1859, 2147483648
    %v1884 = vxor.u32 %v1862, 2147483648
    %v1885 = vxor.u32 %v1867, 2147483648
    %v1886 = vxor.u32 %v1870, 2147483648
    %v1887 = vxor.u32 %v1875, 2147483648
    %v1888 = vxor.u32 %v1878, 2147483648
    %v1889 = vmul.f32 %v1881, 1.442695
    %v1890 = vpow.pop %v1889
    %v1891 = vmul.f32 %v1882, 1.442695
    %v1892 = vpow.pop %v1891
    %v1893 = vmul.f32 %v1883, 1.442695
    %v1894 = vpow.pop %v1893
    %v1895 = vmul.f32 %v1884, 1.442695
    %v1896 = vpow.pop %v1895
    %v1897 = vmul.f32 %v1885, 1.442695
    %v1898 = vpow.pop %v1897
    %v1899 = vmul.f32 %v1886, 1.442695
    %v1900 = vpow.pop %v1899
    %v1901 = vmul.f32 %v1887, 1.442695
    %v1902 = vpow.pop %v1901
    %v1903 = vmul.f32 %v1888, 1.442695
    %v1904 = vpow.pop %v1903
    %v1905 = vadd.f32 %v1890, 1.0
    %v1906 = vadd.f32 %v1892, 1.0
    %v1907 = vadd.f32 %v1894, 1.0
    %v1908 = vadd.f32 %v1896, 1.0
    %v1909 = vadd.f32 %v1898, 1.0
    %v1910 = vadd.f32 %v1900, 1.0
    %v1911 = vadd.f32 %v1902, 1.0
    %v1912 = vadd.f32 %v1904, 1.0
    %v1913 = vrcp.pop %v1905
    %v1914 = vmul.f32 1.0, %v1913
    %v1915 = vrcp.pop %v1906
    %v1916 = vmul.f32 1.0, %v1915
    %v1917 = vrcp.pop %v1907
    %v1918 = vmul.f32 1.0, %v1917
    %v1919 = vrcp.pop %v1908
    %v1920 = vmul.f32 1.0, %v1919
    %v1921 = vrcp.pop %v1909
    %v1922 = vmul.f32 1.0, %v1921
    %v1923 = vrcp.pop %v1910
    %v1924 = vmul.f32 1.0, %v1923
    %v1925 = vrcp.pop %v1911
    %v1926 = vmul.f32 1.0, %v1925
    %v1927 = vrcp.pop %v1912
    %v1928 = vmul.f32 1.0, %v1927
    %1929 = vst.msk [vmem:[%s14] sm:$0xff] %vm81, %v1914
    %1930 = vst.msk [vmem:[%s14 + $0x8] sm:$0xff] %vm81, %v1916
    %1931 = vst.msk [vmem:[%s14 + $0x10] sm:$0xff] %vm81, %v1918
    %1932 = vst.msk [vmem:[%s14 + $0x18] sm:$0xff] %vm81, %v1920
    %1933 = vst.msk [vmem:[%s14 + $0x20] sm:$0xff] %vm81, %v1922
    %1934 = vst.msk [vmem:[%s14 + $0x28] sm:$0xff] %vm81, %v1924
    %1935 = vst.msk [vmem:[%s14 + $0x30] sm:$0xff] %vm81, %v1926
    %1936 = vst.msk [vmem:[%s14 + $0x38] sm:$0xff] %vm81, %v1928
    %1937 = vst.msk [vmem:[#allocation4] sm:$0xff] %vm187, %v1766
    %1939 = vrot.lane.b32.xlu0 %v1757, 96
    %v1940 = vpop.permute.xlu0 %1939
    %1942 = vst.msk [vmem:[#allocation6] sm:$0xff] %vm187, %v1940
    // Predicated region
    $region58: #{rnn_autoencoder_forward.1} parent=1 // pred_check
      _
    $region59: #{rnn_autoencoder_forward.1} parent=1 // pred_check_branch
      %1944 = sbr.rel (0) target = $region61
    $region60: #{rnn_autoencoder_forward.1} parent=1 // pred_region
      _
    $region61: #{rnn_autoencoder_forward.1} parent=1 // pred_fallthru
      _
    // Predicated region
    $region62: #{rnn_autoencoder_forward.1} parent=1 // pred_check
      _
    $region63: #{rnn_autoencoder_forward.1} parent=1 // pred_check_branch
      %1946 = sbr.rel (0) target = $region65
    $region64: #{rnn_autoencoder_forward.1} parent=1 // pred_region
      _
    $region65: #{rnn_autoencoder_forward.1} parent=1 // pred_fallthru
      _
    // Predicated region
    $region66: #{rnn_autoencoder_forward.1} parent=1 // pred_check
      _
    $region67: #{rnn_autoencoder_forward.1} parent=1 // pred_check_branch
      %1948 = sbr.rel (0) target = $region69
    $region68: #{rnn_autoencoder_forward.1} parent=1 // pred_region
      %s1950 = ssub.s32 128, 128
      %1951 = vsyncadd [#allocation5], %s1950
      %s1953 = sshll.u32 [#allocation4], 4
      %s1954 = int_to_ptr.vmem [resolvable:$true] %s1953
      %1956 = dma.vmem_to_hbm [thread:$0]  %s1954, 128, %s16, [#allocation5]
    $region69: #{rnn_autoencoder_forward.1} parent=1 // pred_fallthru
      _
    // Predicated region
    $region70: #{rnn_autoencoder_forward.1} parent=1 // pred_check
      _
    $region71: #{rnn_autoencoder_forward.1} parent=1 // pred_check_branch
      %1958 = sbr.rel (0) target = $region73
    $region72: #{rnn_autoencoder_forward.1} parent=1 // pred_region
      %s1960 = ssub.s32 128, 128
      %1961 = vsyncadd [#allocation7], %s1960
      %s1963 = sshll.u32 [#allocation6], 4
      %s1964 = int_to_ptr.vmem [resolvable:$true] %s1963
      %1966 = dma.vmem_to_hbm [thread:$0]  %s1964, 128, %s17, [#allocation7]
    $region73: #{rnn_autoencoder_forward.1} parent=1 // pred_fallthru
      _
    // Predicated region
    $region74: #{rnn_autoencoder_forward.1} parent=1 // pred_check
      _
    $region75: #{rnn_autoencoder_forward.1} parent=1 // pred_check_branch
      %1968 = sbr.rel (0) target = $region77
    $region76: #{rnn_autoencoder_forward.1} parent=1 // pred_region
      _
    $region77: #{rnn_autoencoder_forward.1} parent=1 // pred_fallthru
      _
    // Predicated region
    $region78: #{rnn_autoencoder_forward.1} parent=1 // pred_check
      _
    $region79: #{rnn_autoencoder_forward.1} parent=1 // pred_check_branch
      %1970 = sbr.rel (0) target = $region81
    $region80: #{rnn_autoencoder_forward.1} parent=1 // pred_region
      _
    $region81: #{rnn_autoencoder_forward.1} parent=1 // pred_fallthru
      _
    // Predicated region
    $region82: #{rnn_autoencoder_forward.1} parent=1 // pred_check
      _
    $region83: #{rnn_autoencoder_forward.1} parent=1 // pred_check_branch
      %1972 = sbr.rel (0) target = $region85
    $region84: #{rnn_autoencoder_forward.1} parent=1 // pred_region
      %1973 = dma.done [#allocation5], 128
    $region85: #{rnn_autoencoder_forward.1} parent=1 // pred_fallthru
      _
    // Predicated region
    $region86: #{rnn_autoencoder_forward.1} parent=1 // pred_check
      _
    $region87: #{rnn_autoencoder_forward.1} parent=1 // pred_check_branch
      %1975 = sbr.rel (0) target = $region89
    $region88: #{rnn_autoencoder_forward.1} parent=1 // pred_region
      %1976 = dma.done [#allocation7], 128
    $region89: #{rnn_autoencoder_forward.1} parent=1 // pred_fallthru
      _
    %1977 = vsyncpa [#allocation5], 1
    %1978 = vsyncpa [#allocation7], 1

</llo_original>
